<compile_context>
chip_gen: v7x
topology: tpu7x:2x2x1
jax: 0.10.0
libtpu: 0.0.40
codegen_flags: <defaults>
</compile_context>

<pallas_src>
import math

import jax
import jax.numpy as jnp
from jax.experimental import pallas as pl
from jax.experimental.pallas import tpu as pltpu

LANE = 128


def _round_up(n, m=LANE):
    return ((n + m - 1) // m) * m


def _pad_axis(x, axis, target):
    if x.shape[axis] == target:
        return x
    pads = [(0, 0)] * x.ndim
    pads[axis] = (0, target - x.shape[axis])
    return jnp.pad(x, pads)


# ----------------------------------------------------------------------------
# Fused kernel: encoder -> instance GCN -> reparam -> decoder -> ELBO/KL
# (dim_importance is an input; its x-independent GNN runs outside the kernel)
# ----------------------------------------------------------------------------
def fused_tree_vae_kernel(
    # inputs
    x_ref,
    enc_w1_ref, enc_b1_ref, enc_wra_ref, enc_bra_ref, enc_wrb_ref, enc_brb_ref,
    w_mu_ref, b_mu_ref, w_lv_ref, b_lv_ref,
    wg_ref, bg_ref, c_chain_ref,
    dim_imp_ref,
    dec_w1_ref, dec_b1_ref, dec_w2_ref, dec_b2_ref,
    # outputs
    recon_ref, v_inst_ref, mean_kl_ref, elbo_ref, nact_ref,
):
    f32 = jnp.float32
    bf16 = jnp.bfloat16

    x = x_ref[...]                                   # [B, F_in] f32
    B = x.shape[0]
    D = w_mu_ref.shape[1]

    # --- encoder (MLP analog of the conv encoder), bf16 matmuls / f32 acc ----
    h = jnp.dot(x.astype(bf16), enc_w1_ref[...], preferred_element_type=f32)
    h = jnp.maximum(h + enc_b1_ref[...], 0.0)
    for l in range(enc_wra_ref.shape[0]):
        r = jnp.dot(h.astype(bf16), enc_wra_ref[l], preferred_element_type=f32)
        r = jnp.maximum(r + enc_bra_ref[l], 0.0)
        h = (h + jnp.dot(r.astype(bf16), enc_wrb_ref[l], preferred_element_type=f32)
             + enc_brb_ref[l])
    hb = h.astype(bf16)
    mu = jnp.dot(hb, w_mu_ref[...], preferred_element_type=f32) + b_mu_ref[...]
    logvar = jnp.dot(hb, w_lv_ref[...], preferred_element_type=f32) + b_lv_ref[...]
    sigma = jnp.exp(0.5 * logvar)
    sigma2 = sigma * sigma                            # reused below (no 2nd exp)

    # --- instance GCN over the chain graph ----------------------------------
    # GCNConv: out = A_hat (X W) + b.  The normalized chain A_hat is
    # tri-diagonal, so the aggregation is a VPU shift-and-add using
    # pltpu.roll on the sublane axis (wrap-around rows are killed by the
    # zero boundary coefficients) instead of a tiny K=B MXU matmul.
    # Weights are bf16 (native MXU path), accumulation f32.
    c_prev = c_chain_ref[0]                          # [B, 1]
    c_self = c_chain_ref[1]
    c_next = c_chain_ref[2]
    h_g = mu
    for l in range(wg_ref.shape[0]):
        xw = jnp.dot(h_g.astype(bf16), wg_ref[l], preferred_element_type=f32)  # [B, D]
        agg = (c_self * xw
               + c_prev * pltpu.roll(xw, 1, axis=0)
               + c_next * pltpu.roll(xw, B - 1, axis=0))
        h_g = jnp.maximum(agg + bg_ref[l], 0.0)
    v_inst = h_g
    v_inst_ref[...] = v_inst

    # --- reparametrization through the tree ----------------------------------
    v = v_inst * dim_imp_ref[...]                     # [B,D] * [1,D]
    z = mu + sigma * v

    # --- decoder --------------------------------------------------------------
    hd = jnp.dot(z.astype(bf16), dec_w1_ref[...], preferred_element_type=f32)
    hd = jnp.maximum(hd + dec_b1_ref[...], 0.0)
    recon = (jnp.dot(hd.astype(bf16), dec_w2_ref[...], preferred_element_type=f32)
             + dec_b2_ref[...])
    recon_ref[...] = recon

    # --- ELBO / KL statistics --------------------------------------------------
    diff = recon - x
    log_px_z = -jnp.sum(diff * diff, keepdims=True)                       # (1,1)
    # prior = -0.5 * sum(z^2 + log(2*pi)) with the constant folded out
    prior = -0.5 * (jnp.sum(z * z, keepdims=True)
                    + float(B * D) * math.log(2.0 * math.pi))
    logvar_eps = jnp.log(sigma2 + 1e-8)               # matches torch log(sigma^2+1e-8)
    entropy = 0.5 * jnp.sum(1.0 + logvar_eps, keepdims=True)
    elbo_ref[...] = log_px_z + prior + entropy

    # KL: exp(logvar_eps) == sigma2 + 1e-8, so no extra exp pass
    kl = -0.5 * (1.0 + logvar_eps - mu * mu - (sigma2 + 1e-8))             # [B,D]
    mean_kl = jnp.mean(kl, axis=0, keepdims=True)                          # [1,D]
    mean_kl_ref[...] = mean_kl
    nact_ref[...] = jnp.sum((mean_kl > 0.01).astype(f32), keepdims=True)   # (1,1)


# ----------------------------------------------------------------------------
# Parameters: logical init + one-time preparation (padding / bf16 / constants)
# ----------------------------------------------------------------------------
def init_params(key, *, in_feat, hidden, res_hidden, n_res, D, E, Hg, L_inst, dec_hidden):
    ks = iter(jax.random.split(key, 32))

    def rnd(shape, scale):
        return jax.random.normal(next(ks), shape, dtype=jnp.float32) * scale

    p = {}
    # encoder
    p["enc_w1"] = rnd((in_feat, hidden), 1.0 / math.sqrt(in_feat))
    p["enc_b1"] = jnp.zeros((1, hidden), jnp.float32)
    p["enc_wra"] = rnd((n_res, hidden, res_hidden), 1.0 / math.sqrt(hidden))
    p["enc_bra"] = jnp.zeros((n_res, 1, res_hidden), jnp.float32)
    p["enc_wrb"] = rnd((n_res, res_hidden, hidden), 1.0 / math.sqrt(res_hidden))
    p["enc_brb"] = jnp.zeros((n_res, 1, hidden), jnp.float32)
    p["w_mu"] = rnd((hidden, D), 1.0 / math.sqrt(hidden))
    p["b_mu"] = jnp.zeros((1, D), jnp.float32)
    p["w_lv"] = rnd((hidden, D), 0.01)
    p["b_lv"] = jnp.zeros((1, D), jnp.float32)
    # instance GCN (num_inst_gnn_layers x GCNConv(D, D))
    p["wg"] = rnd((L_inst, D, D), 1.0 / math.sqrt(D))
    p["bg"] = jnp.zeros((L_inst, 1, D), jnp.float32)
    # dimension graph parameters (torch.randn in the reference)
    p["dim_adj_logits"] = rnd((D, D), 1.0)
    p["dim_embeddings"] = rnd((D, E), 1.0)
    p["wd1"] = rnd((E, Hg), 1.0 / math.sqrt(E))
    p["bd1"] = jnp.zeros((Hg,), jnp.float32)
    p["wd2"] = rnd((Hg, 1), 1.0 / math.sqrt(Hg))
    p["bd2"] = jnp.zeros((1,), jnp.float32)
    # decoder
    p["dec_w1"] = rnd((D, dec_hidden), 1.0 / math.sqrt(D))
    p["dec_b1"] = jnp.zeros((1, dec_hidden), jnp.float32)
    p["dec_w2"] = rnd((dec_hidden, in_feat), 1.0 / math.sqrt(dec_hidden))
    p["dec_b2"] = jnp.zeros((1, in_feat), jnp.float32)
    return p


def chain_gcn_coeffs(num_nodes):
    """[3, B, 1] tri-diagonal coefficients of D^-1/2 (A_chain + I) D^-1/2."""
    idx = jnp.arange(num_nodes)
    a = (jnp.abs(idx[:, None] - idx[None, :]) == 1).astype(jnp.float32)
    a_t = a + jnp.eye(num_nodes, dtype=jnp.float32)
    dinv = 1.0 / jnp.sqrt(jnp.sum(a_t, axis=1))
    a_hat = dinv[:, None] * a_t * dinv[None, :]
    c_prev = jnp.concatenate([jnp.zeros((1,), jnp.float32),
                              jnp.diagonal(a_hat, offset=-1)])     # a_hat[i, i-1]
    c_self = jnp.diagonal(a_hat)                                    # a_hat[i, i]
    c_next = jnp.concatenate([jnp.diagonal(a_hat, offset=1),
                              jnp.zeros((1,), jnp.float32)])        # a_hat[i, i+1]
    return jnp.stack([c_prev, c_self, c_next], axis=0)[:, :, None]


def prepare_params(p, batch_size):
    """One-time padding to 128 lanes, bf16 casting of all matmul weights, the
    static chain-graph normalization, and the constants for the (hoisted)
    x-independent dim-GNN precompute."""
    bf16 = jnp.bfloat16
    Hp = _round_up(p["enc_w1"].shape[1])     # padded hidden
    Rp = _round_up(p["enc_wra"].shape[2])    # padded residual hidden
    Hdp = _round_up(p["dec_w1"].shape[1])    # padded decoder hidden
    D = p["w_mu"].shape[1]

    q = {}
    q["enc_w1"] = _pad_axis(p["enc_w1"], 1, Hp).astype(bf16)
    q["enc_b1"] = _pad_axis(p["enc_b1"], 1, Hp)
    q["enc_wra"] = _pad_axis(_pad_axis(p["enc_wra"], 1, Hp), 2, Rp).astype(bf16)
    q["enc_bra"] = _pad_axis(p["enc_bra"], 2, Rp)
    q["enc_wrb"] = _pad_axis(_pad_axis(p["enc_wrb"], 1, Rp), 2, Hp).astype(bf16)
    q["enc_brb"] = _pad_axis(p["enc_brb"], 2, Hp)
    q["w_mu"] = _pad_axis(p["w_mu"], 0, Hp).astype(bf16)
    q["b_mu"] = p["b_mu"]
    q["w_lv"] = _pad_axis(p["w_lv"], 0, Hp).astype(bf16)
    q["b_lv"] = p["b_lv"]
    # instance GCN weights -> bf16 (biases stay f32)
    q["wg"] = p["wg"].astype(bf16)
    q["bg"] = p["bg"]
    q["c_chain"] = chain_gcn_coeffs(batch_size)
    # dim-GNN constants (consumed by the tiny XLA precompute, NOT the kernel)
    eye = jnp.eye(D, dtype=jnp.float32)
    q["adj_sym_nodiag"] = (p["dim_adj_logits"] + p["dim_adj_logits"].T) * (1.0 - eye)
    q["off_diag"] = 1.0 - eye
    q["emb"] = p["dim_embeddings"]
    q["wd1"] = p["wd1"]
    q["bd1"] = p["bd1"]
    q["wd2"] = p["wd2"]
    q["bd2"] = p["bd2"]
    # decoder
    q["dec_w1"] = _pad_axis(p["dec_w1"], 1, Hdp).astype(bf16)
    q["dec_b1"] = _pad_axis(p["dec_b1"], 1, Hdp)
    q["dec_w2"] = _pad_axis(p["dec_w2"], 0, Hdp).astype(bf16)
    q["dec_b2"] = p["dec_b2"]
    return q


def _compute_dim_importance(q):
    """compute_dim_gnn(): x-independent, runs as a tiny plain-XLA precompute."""
    f32 = jnp.float32
    D = q["adj_sym_nodiag"].shape[0]
    probs = jax.nn.sigmoid(q["adj_sym_nodiag"])            # diag logits are 0
    mask = (probs > 0.5).astype(f32) * q["off_diag"]        # diag excluded
    num_edges = jnp.sum(mask)
    mask = jnp.where(num_edges > 0.0, mask, q["off_diag"])  # fallback: fully connected
    a_t = mask + jnp.eye(D, dtype=f32)                      # GCNConv adds self loops
    dinv = jax.lax.rsqrt(jnp.sum(a_t, axis=1))
    a_hat = dinv[:, None] * a_t * dinv[None, :]
    x1 = jnp.maximum(jnp.dot(a_hat, jnp.dot(q["emb"], q["wd1"])) + q["bd1"], 0.0)
    x2 = jnp.dot(a_hat, jnp.dot(x1, q["wd2"])) + q["bd2"]   # [D, 1]
    return x2.reshape(1, D)                                 # [1, D]


# ----------------------------------------------------------------------------
# Forward: one fused pallas_call, everything resident in VMEM
# ----------------------------------------------------------------------------
@jax.jit
def pyg_tree_vae_forward(x, q):
    B, C, H, W = x.shape
    F_in = C * H * W
    D = q["w_mu"].shape[1]
    f32 = jnp.float32

    x_flat = x.reshape(B, F_in)
    dim_imp = _compute_dim_importance(q)                    # [1, D]

    args = [
        x_flat,
        q["enc_w1"], q["enc_b1"], q["enc_wra"], q["enc_bra"], q["enc_wrb"], q["enc_brb"],
        q["w_mu"], q["b_mu"], q["w_lv"], q["b_lv"],
        q["wg"], q["bg"], q["c_chain"],
        dim_imp,
        q["dec_w1"], q["dec_b1"], q["dec_w2"], q["dec_b2"],
    ]

    out_shapes = (
        jax.ShapeDtypeStruct((B, F_in), f32),   # recon (flattened)
        jax.ShapeDtypeStruct((B, D), f32),      # v_inst
        jax.ShapeDtypeStruct((1, D), f32),      # mean_kl_per_dim
        jax.ShapeDtypeStruct((1, 1), f32),      # elbo
        jax.ShapeDtypeStruct((1, 1), f32),      # num_active_dims (as float)
    )

    # advisory cost hint for the XLA scheduler (dim-GNN no longer in-kernel)
    Hp = q["enc_w1"].shape[1]
    Rp = q["enc_wra"].shape[2]
    n_res = q["enc_wra"].shape[0]
    L = q["wg"].shape[0]
    Hdp = q["dec_w1"].shape[1]
    flops = 2 * B * (F_in * Hp + n_res * 2 * Hp * Rp + 2 * Hp * D
                     + L * D * D + D * Hdp + Hdp * F_in)
    transcendentals = 2 * B * D
    bytes_accessed = sum(int(math.prod(a.shape)) * a.dtype.itemsize for a in args)
    bytes_accessed += sum(int(math.prod(s.shape)) * s.dtype.itemsize for s in out_shapes)

    vmem_spec = pl.BlockSpec(memory_space=pltpu.MemorySpace.VMEM)
    recon_flat, v_inst, mean_kl, elbo, nact = pl.pallas_call(
        fused_tree_vae_kernel,
        out_shape=out_shapes,
        in_specs=[vmem_spec] * len(args),
        out_specs=tuple(pl.BlockSpec(memory_space=pltpu.MemorySpace.VMEM)
                        for _ in out_shapes),
        cost_estimate=pl.CostEstimate(flops=flops,
                                      transcendentals=transcendentals,
                                      bytes_accessed=bytes_accessed),
    )(*args)

    return {
        "recon": recon_flat.reshape(B, C, H, W),
        "elbo": elbo[0, 0],
        "num_active_dims": nact[0, 0].astype(jnp.int32),
        "dim_importance": dim_imp[0],
        "v_inst": v_inst,
        "mean_kl_per_dim": mean_kl[0],
    }


# ----------------------------------------------------------------------------
# main
# ----------------------------------------------------------------------------
if __name__ == "__main__":
    # small shapes consistent with the module:
    #   x: [B=8, C=4, H=16, W=16]  (NCHW, flattened to 1024 features)
    #   hidden_dim=64, residual_hiddens=32, num_residual_layers=2
    #   latent_dim=128, emb_dim=16, hidden_dim_gnn=32, num_inst_gnn_layers=2
    B, C, H, W = 8, 4, 16, 16
    hidden_dim, residual_hiddens, num_residual_layers = 64, 32, 2
    latent_dim, emb_dim, hidden_dim_gnn, num_inst_gnn_layers = 128, 16, 32, 2

    key = jax.random.PRNGKey(0)
    k_x, k_p = jax.random.split(key)
    x = jax.random.normal(k_x, (B, C, H, W), dtype=jnp.float32)

    params = init_params(
        k_p,
        in_feat=C * H * W,
        hidden=hidden_dim,
        res_hidden=residual_hiddens,
        n_res=num_residual_layers,
        D=latent_dim,
        E=emb_dim,
        Hg=hidden_dim_gnn,
        L_inst=num_inst_gnn_layers,
        dec_hidden=hidden_dim,
    )
    prepped = prepare_params(params, batch_size=B)

    out = pyg_tree_vae_forward(x, prepped)
    jax.block_until_ready(out)

    assert out["recon"].shape == (B, C, H, W)
    assert out["v_inst"].shape == (B, latent_dim)
    assert out["dim_importance"].shape == (latent_dim,)
    assert out["mean_kl_per_dim"].shape == (latent_dim,)
    print("KERNEL_OK")
</pallas_src>

<mosaic_0001>
module attributes {stable_mosaic.version = 11 : i64} {
  func.func @fused_tree_vae_kernel(%arg0: memref<8x1024xf32, #tpu.memory_space<vmem>>, %arg1: memref<1024x128xbf16, #tpu.memory_space<vmem>>, %arg2: memref<1x128xf32, #tpu.memory_space<vmem>>, %arg3: memref<2x128x128xbf16, #tpu.memory_space<vmem>>, %arg4: memref<2x1x128xf32, #tpu.memory_space<vmem>>, %arg5: memref<2x128x128xbf16, #tpu.memory_space<vmem>>, %arg6: memref<2x1x128xf32, #tpu.memory_space<vmem>>, %arg7: memref<128x128xbf16, #tpu.memory_space<vmem>>, %arg8: memref<1x128xf32, #tpu.memory_space<vmem>>, %arg9: memref<128x128xbf16, #tpu.memory_space<vmem>>, %arg10: memref<1x128xf32, #tpu.memory_space<vmem>>, %arg11: memref<2x128x128xbf16, #tpu.memory_space<vmem>>, %arg12: memref<2x1x128xf32, #tpu.memory_space<vmem>>, %arg13: memref<3x8x1xf32, #tpu.memory_space<vmem>>, %arg14: memref<1x128xf32, #tpu.memory_space<vmem>>, %arg15: memref<128x128xbf16, #tpu.memory_space<vmem>>, %arg16: memref<1x128xf32, #tpu.memory_space<vmem>>, %arg17: memref<128x1024xbf16, #tpu.memory_space<vmem>>, %arg18: memref<1x1024xf32, #tpu.memory_space<vmem>>, %arg19: memref<8x1024xf32, #tpu.memory_space<vmem>>, %arg20: memref<8x128xf32, #tpu.memory_space<vmem>>, %arg21: memref<1x128xf32, #tpu.memory_space<vmem>>, %arg22: memref<1x1xf32, #tpu.memory_space<vmem>>, %arg23: memref<1x1xf32, #tpu.memory_space<vmem>>) attributes {dimension_semantics = [], scalar_prefetch = 0 : i64, scratch_operands = 0 : i64, tpu.core_type = #tpu.core_type<tc>} {
    %c0 = arith.constant 0 : index
    %c0_0 = arith.constant 0 : index
    %0 = vector.load %arg0[%c0, %c0_0] : memref<8x1024xf32, #tpu.memory_space<vmem>>, vector<8x1024xf32>
    %1 = arith.truncf %0 : vector<8x1024xf32> to vector<8x1024xbf16>
    %c0_1 = arith.constant 0 : index
    %c0_2 = arith.constant 0 : index
    %2 = vector.load %arg1[%c0_1, %c0_2] : memref<1024x128xbf16, #tpu.memory_space<vmem>>, vector<1024x128xbf16>
    %cst = arith.constant dense<0.000000e+00> : vector<8x128xf32>
    %3 = tpu.matmul %1, %2, %cst {dimension_numbers = #tpu.dot_dimension_numbers<[1], [0], [0], [1], [0, 0, 1, 1], [], []>} : vector<8x1024xbf16>, vector<1024x128xbf16>, vector<8x128xf32> -> vector<8x128xf32>
    %c0_3 = arith.constant 0 : index
    %c0_4 = arith.constant 0 : index
    %4 = vector.load %arg2[%c0_3, %c0_4] : memref<1x128xf32, #tpu.memory_space<vmem>>, vector<1x128xf32>
    %5 = vector.broadcast %4 : vector<1x128xf32> to vector<8x128xf32>
    %6 = arith.addf %3, %5 : vector<8x128xf32>
    %cst_5 = arith.constant 0.000000e+00 : f32
    %7 = vector.broadcast %cst_5 : f32 to vector<8x128xf32>
    %8 = arith.maximumf %6, %7 : vector<8x128xf32>
    %9 = arith.truncf %8 : vector<8x128xf32> to vector<8x128xbf16>
    %c0_6 = arith.constant 0 : index
    %c0_7 = arith.constant 0 : index
    %c0_8 = arith.constant 0 : index
    %10 = vector.load %arg3[%c0_6, %c0_7, %c0_8] : memref<2x128x128xbf16, #tpu.memory_space<vmem>>, vector<1x128x128xbf16>
    %11 = vector.shape_cast %10 : vector<1x128x128xbf16> to vector<128x128xbf16>
    %cst_9 = arith.constant dense<0.000000e+00> : vector<8x128xf32>
    %12 = tpu.matmul %9, %11, %cst_9 {dimension_numbers = #tpu.dot_dimension_numbers<[1], [0], [0], [1], [0, 0, 1, 1], [], []>} : vector<8x128xbf16>, vector<128x128xbf16>, vector<8x128xf32> -> vector<8x128xf32>
    %c0_10 = arith.constant 0 : index
    %c0_11 = arith.constant 0 : index
    %c0_12 = arith.constant 0 : index
    %13 = vector.load %arg4[%c0_10, %c0_11, %c0_12] : memref<2x1x128xf32, #tpu.memory_space<vmem>>, vector<1x1x128xf32>
    %14 = vector.shape_cast %13 : vector<1x1x128xf32> to vector<1x128xf32>
    %15 = vector.broadcast %14 : vector<1x128xf32> to vector<8x128xf32>
    %16 = arith.addf %12, %15 : vector<8x128xf32>
    %cst_13 = arith.constant 0.000000e+00 : f32
    %17 = vector.broadcast %cst_13 : f32 to vector<8x128xf32>
    %18 = arith.maximumf %16, %17 : vector<8x128xf32>
    %19 = arith.truncf %18 : vector<8x128xf32> to vector<8x128xbf16>
    %c0_14 = arith.constant 0 : index
    %c0_15 = arith.constant 0 : index
    %c0_16 = arith.constant 0 : index
    %20 = vector.load %arg5[%c0_14, %c0_15, %c0_16] : memref<2x128x128xbf16, #tpu.memory_space<vmem>>, vector<1x128x128xbf16>
    %21 = vector.shape_cast %20 : vector<1x128x128xbf16> to vector<128x128xbf16>
    %cst_17 = arith.constant dense<0.000000e+00> : vector<8x128xf32>
    %22 = tpu.matmul %19, %21, %cst_17 {dimension_numbers = #tpu.dot_dimension_numbers<[1], [0], [0], [1], [0, 0, 1, 1], [], []>} : vector<8x128xbf16>, vector<128x128xbf16>, vector<8x128xf32> -> vector<8x128xf32>
    %23 = arith.addf %8, %22 : vector<8x128xf32>
    %c0_18 = arith.constant 0 : index
    %c0_19 = arith.constant 0 : index
    %c0_20 = arith.constant 0 : index
    %24 = vector.load %arg6[%c0_18, %c0_19, %c0_20] : memref<2x1x128xf32, #tpu.memory_space<vmem>>, vector<1x1x128xf32>
    %25 = vector.shape_cast %24 : vector<1x1x128xf32> to vector<1x128xf32>
    %26 = vector.broadcast %25 : vector<1x128xf32> to vector<8x128xf32>
    %27 = arith.addf %23, %26 : vector<8x128xf32>
    %28 = arith.truncf %27 : vector<8x128xf32> to vector<8x128xbf16>
    %c1 = arith.constant 1 : index
    %c0_21 = arith.constant 0 : index
    %c0_22 = arith.constant 0 : index
    %29 = vector.load %arg3[%c1, %c0_21, %c0_22] : memref<2x128x128xbf16, #tpu.memory_space<vmem>>, vector<1x128x128xbf16>
    %30 = vector.shape_cast %29 : vector<1x128x128xbf16> to vector<128x128xbf16>
    %cst_23 = arith.constant dense<0.000000e+00> : vector<8x128xf32>
    %31 = tpu.matmul %28, %30, %cst_23 {dimension_numbers = #tpu.dot_dimension_numbers<[1], [0], [0], [1], [0, 0, 1, 1], [], []>} : vector<8x128xbf16>, vector<128x128xbf16>, vector<8x128xf32> -> vector<8x128xf32>
    %c1_24 = arith.constant 1 : index
    %c0_25 = arith.constant 0 : index
    %c0_26 = arith.constant 0 : index
    %32 = vector.load %arg4[%c1_24, %c0_25, %c0_26] : memref<2x1x128xf32, #tpu.memory_space<vmem>>, vector<1x1x128xf32>
    %33 = vector.shape_cast %32 : vector<1x1x128xf32> to vector<1x128xf32>
    %34 = vector.broadcast %33 : vector<1x128xf32> to vector<8x128xf32>
    %35 = arith.addf %31, %34 : vector<8x128xf32>
    %cst_27 = arith.constant 0.000000e+00 : f32
    %36 = vector.broadcast %cst_27 : f32 to vector<8x128xf32>
    %37 = arith.maximumf %35, %36 : vector<8x128xf32>
    %38 = arith.truncf %37 : vector<8x128xf32> to vector<8x128xbf16>
    %c1_28 = arith.constant 1 : index
    %c0_29 = arith.constant 0 : index
    %c0_30 = arith.constant 0 : index
    %39 = vector.load %arg5[%c1_28, %c0_29, %c0_30] : memref<2x128x128xbf16, #tpu.memory_space<vmem>>, vector<1x128x128xbf16>
    %40 = vector.shape_cast %39 : vector<1x128x128xbf16> to vector<128x128xbf16>
    %cst_31 = arith.constant dense<0.000000e+00> : vector<8x128xf32>
    %41 = tpu.matmul %38, %40, %cst_31 {dimension_numbers = #tpu.dot_dimension_numbers<[1], [0], [0], [1], [0, 0, 1, 1], [], []>} : vector<8x128xbf16>, vector<128x128xbf16>, vector<8x128xf32> -> vector<8x128xf32>
    %42 = arith.addf %27, %41 : vector<8x128xf32>
    %c1_32 = arith.constant 1 : index
    %c0_33 = arith.constant 0 : index
    %c0_34 = arith.constant 0 : index
    %43 = vector.load %arg6[%c1_32, %c0_33, %c0_34] : memref<2x1x128xf32, #tpu.memory_space<vmem>>, vector<1x1x128xf32>
    %44 = vector.shape_cast %43 : vector<1x1x128xf32> to vector<1x128xf32>
    %45 = vector.broadcast %44 : vector<1x128xf32> to vector<8x128xf32>
    %46 = arith.addf %42, %45 : vector<8x128xf32>
    %47 = arith.truncf %46 : vector<8x128xf32> to vector<8x128xbf16>
    %c0_35 = arith.constant 0 : index
    %c0_36 = arith.constant 0 : index
    %48 = vector.load %arg7[%c0_35, %c0_36] : memref<128x128xbf16, #tpu.memory_space<vmem>>, vector<128x128xbf16>
    %cst_37 = arith.constant dense<0.000000e+00> : vector<8x128xf32>
    %49 = tpu.matmul %47, %48, %cst_37 {dimension_numbers = #tpu.dot_dimension_numbers<[1], [0], [0], [1], [0, 0, 1, 1], [], []>} : vector<8x128xbf16>, vector<128x128xbf16>, vector<8x128xf32> -> vector<8x128xf32>
    %c0_38 = arith.constant 0 : index
    %c0_39 = arith.constant 0 : index
    %50 = vector.load %arg8[%c0_38, %c0_39] : memref<1x128xf32, #tpu.memory_space<vmem>>, vector<1x128xf32>
    %51 = vector.broadcast %50 : vector<1x128xf32> to vector<8x128xf32>
    %52 = arith.addf %49, %51 : vector<8x128xf32>
    %c0_40 = arith.constant 0 : index
    %c0_41 = arith.constant 0 : index
    %53 = vector.load %arg9[%c0_40, %c0_41] : memref<128x128xbf16, #tpu.memory_space<vmem>>, vector<128x128xbf16>
    %cst_42 = arith.constant dense<0.000000e+00> : vector<8x128xf32>
    %54 = tpu.matmul %47, %53, %cst_42 {dimension_numbers = #tpu.dot_dimension_numbers<[1], [0], [0], [1], [0, 0, 1, 1], [], []>} : vector<8x128xbf16>, vector<128x128xbf16>, vector<8x128xf32> -> vector<8x128xf32>
    %c0_43 = arith.constant 0 : index
    %c0_44 = arith.constant 0 : index
    %55 = vector.load %arg10[%c0_43, %c0_44] : memref<1x128xf32, #tpu.memory_space<vmem>>, vector<1x128xf32>
    %56 = vector.broadcast %55 : vector<1x128xf32> to vector<8x128xf32>
    %57 = arith.addf %54, %56 : vector<8x128xf32>
    %cst_45 = arith.constant 5.000000e-01 : f32
    %58 = vector.broadcast %cst_45 : f32 to vector<8x128xf32>
    %59 = arith.mulf %58, %57 : vector<8x128xf32>
    %60 = math.exp %59 : vector<8x128xf32>
    %61 = arith.mulf %60, %60 : vector<8x128xf32>
    %c0_46 = arith.constant 0 : index
    %c0_47 = arith.constant 0 : index
    %c0_48 = arith.constant 0 : index
    %62 = vector.load %arg13[%c0_46, %c0_47, %c0_48] : memref<3x8x1xf32, #tpu.memory_space<vmem>>, vector<1x8x1xf32>
    %63 = vector.shape_cast %62 : vector<1x8x1xf32> to vector<8x1xf32>
    %c1_49 = arith.constant 1 : index
    %c0_50 = arith.constant 0 : index
    %c0_51 = arith.constant 0 : index
    %64 = vector.load %arg13[%c1_49, %c0_50, %c0_51] : memref<3x8x1xf32, #tpu.memory_space<vmem>>, vector<1x8x1xf32>
    %65 = vector.shape_cast %64 : vector<1x8x1xf32> to vector<8x1xf32>
    %c2 = arith.constant 2 : index
    %c0_52 = arith.constant 0 : index
    %c0_53 = arith.constant 0 : index
    %66 = vector.load %arg13[%c2, %c0_52, %c0_53] : memref<3x8x1xf32, #tpu.memory_space<vmem>>, vector<1x8x1xf32>
    %67 = vector.shape_cast %66 : vector<1x8x1xf32> to vector<8x1xf32>
    %68 = arith.truncf %52 : vector<8x128xf32> to vector<8x128xbf16>
    %c0_54 = arith.constant 0 : index
    %c0_55 = arith.constant 0 : index
    %c0_56 = arith.constant 0 : index
    %69 = vector.load %arg11[%c0_54, %c0_55, %c0_56] : memref<2x128x128xbf16, #tpu.memory_space<vmem>>, vector<1x128x128xbf16>
    %70 = vector.shape_cast %69 : vector<1x128x128xbf16> to vector<128x128xbf16>
    %cst_57 = arith.constant dense<0.000000e+00> : vector<8x128xf32>
    %71 = tpu.matmul %68, %70, %cst_57 {dimension_numbers = #tpu.dot_dimension_numbers<[1], [0], [0], [1], [0, 0, 1, 1], [], []>} : vector<8x128xbf16>, vector<128x128xbf16>, vector<8x128xf32> -> vector<8x128xf32>
    %72 = vector.broadcast %65 : vector<8x1xf32> to vector<8x128xf32>
    %73 = arith.mulf %72, %71 : vector<8x128xf32>
    %c1_i32 = arith.constant 1 : i32
    %74 = tpu.dynamic_rotate %71 by %c1_i32 dim 0 : vector<8x128xf32>, i32 -> vector<8x128xf32>
    %75 = vector.broadcast %63 : vector<8x1xf32> to vector<8x128xf32>
    %76 = arith.mulf %75, %74 : vector<8x128xf32>
    %77 = arith.addf %73, %76 : vector<8x128xf32>
    %c7_i32 = arith.constant 7 : i32
    %78 = tpu.dynamic_rotate %71 by %c7_i32 dim 0 : vector<8x128xf32>, i32 -> vector<8x128xf32>
    %79 = vector.broadcast %67 : vector<8x1xf32> to vector<8x128xf32>
    %80 = arith.mulf %79, %78 : vector<8x128xf32>
    %81 = arith.addf %77, %80 : vector<8x128xf32>
    %c0_58 = arith.constant 0 : index
    %c0_59 = arith.constant 0 : index
    %c0_60 = arith.constant 0 : index
    %82 = vector.load %arg12[%c0_58, %c0_59, %c0_60] : memref<2x1x128xf32, #tpu.memory_space<vmem>>, vector<1x1x128xf32>
    %83 = vector.shape_cast %82 : vector<1x1x128xf32> to vector<1x128xf32>
    %84 = vector.broadcast %83 : vector<1x128xf32> to vector<8x128xf32>
    %85 = arith.addf %81, %84 : vector<8x128xf32>
    %cst_61 = arith.constant 0.000000e+00 : f32
    %86 = vector.broadcast %cst_61 : f32 to vector<8x128xf32>
    %87 = arith.maximumf %85, %86 : vector<8x128xf32>
    %88 = arith.truncf %87 : vector<8x128xf32> to vector<8x128xbf16>
    %c1_62 = arith.constant 1 : index
    %c0_63 = arith.constant 0 : index
    %c0_64 = arith.constant 0 : index
    %89 = vector.load %arg11[%c1_62, %c0_63, %c0_64] : memref<2x128x128xbf16, #tpu.memory_space<vmem>>, vector<1x128x128xbf16>
    %90 = vector.shape_cast %89 : vector<1x128x128xbf16> to vector<128x128xbf16>
    %cst_65 = arith.constant dense<0.000000e+00> : vector<8x128xf32>
    %91 = tpu.matmul %88, %90, %cst_65 {dimension_numbers = #tpu.dot_dimension_numbers<[1], [0], [0], [1], [0, 0, 1, 1], [], []>} : vector<8x128xbf16>, vector<128x128xbf16>, vector<8x128xf32> -> vector<8x128xf32>
    %92 = vector.broadcast %65 : vector<8x1xf32> to vector<8x128xf32>
    %93 = arith.mulf %92, %91 : vector<8x128xf32>
    %c1_i32_66 = arith.constant 1 : i32
    %94 = tpu.dynamic_rotate %91 by %c1_i32_66 dim 0 : vector<8x128xf32>, i32 -> vector<8x128xf32>
    %95 = vector.broadcast %63 : vector<8x1xf32> to vector<8x128xf32>
    %96 = arith.mulf %95, %94 : vector<8x128xf32>
    %97 = arith.addf %93, %96 : vector<8x128xf32>
    %c7_i32_67 = arith.constant 7 : i32
    %98 = tpu.dynamic_rotate %91 by %c7_i32_67 dim 0 : vector<8x128xf32>, i32 -> vector<8x128xf32>
    %99 = vector.broadcast %67 : vector<8x1xf32> to vector<8x128xf32>
    %100 = arith.mulf %99, %98 : vector<8x128xf32>
    %101 = arith.addf %97, %100 : vector<8x128xf32>
    %c1_68 = arith.constant 1 : index
    %c0_69 = arith.constant 0 : index
    %c0_70 = arith.constant 0 : index
    %102 = vector.load %arg12[%c1_68, %c0_69, %c0_70] : memref<2x1x128xf32, #tpu.memory_space<vmem>>, vector<1x1x128xf32>
    %103 = vector.shape_cast %102 : vector<1x1x128xf32> to vector<1x128xf32>
    %104 = vector.broadcast %103 : vector<1x128xf32> to vector<8x128xf32>
    %105 = arith.addf %101, %104 : vector<8x128xf32>
    %cst_71 = arith.constant 0.000000e+00 : f32
    %106 = vector.broadcast %cst_71 : f32 to vector<8x128xf32>
    %107 = arith.maximumf %105, %106 : vector<8x128xf32>
    %c0_72 = arith.constant 0 : index
    %c0_73 = arith.constant 0 : index
    %108 = vector.load %arg20[%c0_72, %c0_73] : memref<8x128xf32, #tpu.memory_space<vmem>>, vector<8x128xf32>
    tpu.vector_store %arg20[%c0_72, %c0_73], %107 {strides = array<i32>} : memref<8x128xf32, #tpu.memory_space<vmem>>, vector<8x128xf32>,
    %c0_74 = arith.constant 0 : index
    %c0_75 = arith.constant 0 : index
    %109 = vector.load %arg14[%c0_74, %c0_75] : memref<1x128xf32, #tpu.memory_space<vmem>>, vector<1x128xf32>
    %110 = vector.broadcast %109 : vector<1x128xf32> to vector<8x128xf32>
    %111 = arith.mulf %107, %110 : vector<8x128xf32>
    %112 = arith.mulf %60, %111 : vector<8x128xf32>
    %113 = arith.addf %52, %112 : vector<8x128xf32>
    %114 = arith.truncf %113 : vector<8x128xf32> to vector<8x128xbf16>
    %c0_76 = arith.constant 0 : index
    %c0_77 = arith.constant 0 : index
    %115 = vector.load %arg15[%c0_76, %c0_77] : memref<128x128xbf16, #tpu.memory_space<vmem>>, vector<128x128xbf16>
    %cst_78 = arith.constant dense<0.000000e+00> : vector<8x128xf32>
    %116 = tpu.matmul %114, %115, %cst_78 {dimension_numbers = #tpu.dot_dimension_numbers<[1], [0], [0], [1], [0, 0, 1, 1], [], []>} : vector<8x128xbf16>, vector<128x128xbf16>, vector<8x128xf32> -> vector<8x128xf32>
    %c0_79 = arith.constant 0 : index
    %c0_80 = arith.constant 0 : index
    %117 = vector.load %arg16[%c0_79, %c0_80] : memref<1x128xf32, #tpu.memory_space<vmem>>, vector<1x128xf32>
    %118 = vector.broadcast %117 : vector<1x128xf32> to vector<8x128xf32>
    %119 = arith.addf %116, %118 : vector<8x128xf32>
    %cst_81 = arith.constant 0.000000e+00 : f32
    %120 = vector.broadcast %cst_81 : f32 to vector<8x128xf32>
    %121 = arith.maximumf %119, %120 : vector<8x128xf32>
    %122 = arith.truncf %121 : vector<8x128xf32> to vector<8x128xbf16>
    %c0_82 = arith.constant 0 : index
    %c0_83 = arith.constant 0 : index
    %123 = vector.load %arg17[%c0_82, %c0_83] : memref<128x1024xbf16, #tpu.memory_space<vmem>>, vector<128x1024xbf16>
    %cst_84 = arith.constant dense<0.000000e+00> : vector<8x1024xf32>
    %124 = tpu.matmul %122, %123, %cst_84 {dimension_numbers = #tpu.dot_dimension_numbers<[1], [0], [0], [1], [0, 0, 1, 1], [], []>} : vector<8x128xbf16>, vector<128x1024xbf16>, vector<8x1024xf32> -> vector<8x1024xf32>
    %c0_85 = arith.constant 0 : index
    %c0_86 = arith.constant 0 : index
    %125 = vector.load %arg18[%c0_85, %c0_86] : memref<1x1024xf32, #tpu.memory_space<vmem>>, vector<1x1024xf32>
    %126 = vector.broadcast %125 : vector<1x1024xf32> to vector<8x1024xf32>
    %127 = arith.addf %124, %126 : vector<8x1024xf32>
    %c0_87 = arith.constant 0 : index
    %c0_88 = arith.constant 0 : index
    %128 = vector.load %arg19[%c0_87, %c0_88] : memref<8x1024xf32, #tpu.memory_space<vmem>>, vector<8x1024xf32>
    tpu.vector_store %arg19[%c0_87, %c0_88], %127 {strides = array<i32>} : memref<8x1024xf32, #tpu.memory_space<vmem>>, vector<8x1024xf32>,
    %129 = arith.subf %127, %0 : vector<8x1024xf32>
    %130 = arith.mulf %129, %129 : vector<8x1024xf32>
    %131 = vector.shape_cast %130 : vector<8x1024xf32> to vector<1x8x1024xf32>
    %cst_89 = arith.constant dense<0.000000e+00> : vector<1xf32>
    %132 = vector.multi_reduction <add>, %131, %cst_89 [1, 2] : vector<1x8x1024xf32> to vector<1xf32>
    %133 = vector.shape_cast %132 : vector<1xf32> to vector<1x1x1xf32>
    %134 = vector.extract %133[0, 0, 0] : f32 from vector<1x1x1xf32>
    %135 = vector.broadcast %134 : f32 to vector<1x1xf32>
    %cst_90 = arith.constant 0.000000e+00 : f32
    %136 = vector.broadcast %cst_90 : f32 to vector<1x1xf32>
    %137 = arith.subf %136, %135 : vector<1x1xf32>
    %138 = arith.mulf %113, %113 : vector<8x128xf32>
    %139 = vector.shape_cast %138 : vector<8x128xf32> to vector<1x8x128xf32>
    %cst_91 = arith.constant dense<0.000000e+00> : vector<1xf32>
    %140 = vector.multi_reduction <add>, %139, %cst_91 [1, 2] : vector<1x8x128xf32> to vector<1xf32>
    %141 = vector.shape_cast %140 : vector<1xf32> to vector<1x1x1xf32>
    %142 = vector.extract %141[0, 0, 0] : f32 from vector<1x1x1xf32>
    %143 = vector.broadcast %142 : f32 to vector<1x1xf32>
    %cst_92 = arith.constant 1881.98608 : f32
    %144 = vector.broadcast %cst_92 : f32 to vector<1x1xf32>
    %145 = arith.addf %143, %144 : vector<1x1xf32>
    %cst_93 = arith.constant -5.000000e-01 : f32
    %146 = vector.broadcast %cst_93 : f32 to vector<1x1xf32>
    %147 = arith.mulf %146, %145 : vector<1x1xf32>
    %cst_94 = arith.constant 9.99999993E-9 : f32
    %148 = vector.broadcast %cst_94 : f32 to vector<8x128xf32>
    %149 = arith.addf %61, %148 : vector<8x128xf32>
    %150 = math.log %149 : vector<8x128xf32>
    %cst_95 = arith.constant 1.000000e+00 : f32
    %151 = vector.broadcast %cst_95 : f32 to vector<8x128xf32>
    %152 = arith.addf %151, %150 : vector<8x128xf32>
    %153 = vector.shape_cast %152 : vector<8x128xf32> to vector<1x8x128xf32>
    %cst_96 = arith.constant dense<0.000000e+00> : vector<1xf32>
    %154 = vector.multi_reduction <add>, %153, %cst_96 [1, 2] : vector<1x8x128xf32> to vector<1xf32>
    %155 = vector.shape_cast %154 : vector<1xf32> to vector<1x1x1xf32>
    %156 = vector.extract %155[0, 0, 0] : f32 from vector<1x1x1xf32>
    %157 = vector.broadcast %156 : f32 to vector<1x1xf32>
    %cst_97 = arith.constant 5.000000e-01 : f32
    %158 = vector.broadcast %cst_97 : f32 to vector<1x1xf32>
    %159 = arith.mulf %158, %157 : vector<1x1xf32>
    %160 = arith.addf %137, %147 : vector<1x1xf32>
    %161 = arith.addf %160, %159 : vector<1x1xf32>
    %c0_98 = arith.constant 0 : index
    %c0_99 = arith.constant 0 : index
    %162 = vector.load %arg22[%c0_98, %c0_99] : memref<1x1xf32, #tpu.memory_space<vmem>>, vector<1x1xf32>
    tpu.vector_store %arg22[%c0_98, %c0_99], %161 {strides = array<i32>} : memref<1x1xf32, #tpu.memory_space<vmem>>, vector<1x1xf32>,
    %cst_100 = arith.constant 1.000000e+00 : f32
    %163 = vector.broadcast %cst_100 : f32 to vector<8x128xf32>
    %164 = arith.addf %163, %150 : vector<8x128xf32>
    %165 = arith.mulf %52, %52 : vector<8x128xf32>
    %166 = arith.subf %164, %165 : vector<8x128xf32>
    %cst_101 = arith.constant 9.99999993E-9 : f32
    %167 = vector.broadcast %cst_101 : f32 to vector<8x128xf32>
    %168 = arith.addf %61, %167 : vector<8x128xf32>
    %169 = arith.subf %166, %168 : vector<8x128xf32>
    %cst_102 = arith.constant -5.000000e-01 : f32
    %170 = vector.broadcast %cst_102 : f32 to vector<8x128xf32>
    %171 = arith.mulf %170, %169 : vector<8x128xf32>
    %cst_103 = arith.constant dense<0.000000e+00> : vector<128xf32>
    %172 = vector.multi_reduction <add>, %171, %cst_103 [0] : vector<8x128xf32> to vector<128xf32>
    %173 = vector.shape_cast %172 : vector<128xf32> to vector<1x128xf32>
    %cst_104 = arith.constant 8.000000e+00 : f32
    %174 = vector.broadcast %cst_104 : f32 to vector<1x128xf32>
    %175 = arith.divf %173, %174 : vector<1x128xf32>
    %c0_105 = arith.constant 0 : index
    %c0_106 = arith.constant 0 : index
    %176 = vector.load %arg21[%c0_105, %c0_106] : memref<1x128xf32, #tpu.memory_space<vmem>>, vector<1x128xf32>
    tpu.vector_store %arg21[%c0_105, %c0_106], %175 {strides = array<i32>} : memref<1x128xf32, #tpu.memory_space<vmem>>, vector<1x128xf32>,
    %cst_107 = arith.constant 0.00999999977 : f32
    %177 = vector.broadcast %cst_107 : f32 to vector<1x128xf32>
    %178 = arith.cmpf ogt, %175, %177 : vector<1x128xf32>
    %179 = arith.extui %178 : vector<1x128xi1> to vector<1x128xi32>
    %180 = arith.sitofp %179 : vector<1x128xi32> to vector<1x128xf32>
    %181 = vector.shape_cast %180 : vector<1x128xf32> to vector<1x1x128xf32>
    %cst_108 = arith.constant dense<0.000000e+00> : vector<1xf32>
    %182 = vector.multi_reduction <add>, %181, %cst_108 [1, 2] : vector<1x1x128xf32> to vector<1xf32>
    %183 = vector.shape_cast %182 : vector<1xf32> to vector<1x1x1xf32>
    %184 = vector.extract %183[0, 0, 0] : f32 from vector<1x1x1xf32>
    %185 = vector.broadcast %184 : f32 to vector<1x1xf32>
    %c0_109 = arith.constant 0 : index
    %c0_110 = arith.constant 0 : index
    %186 = vector.load %arg23[%c0_109, %c0_110] : memref<1x1xf32, #tpu.memory_space<vmem>>, vector<1x1xf32>
    tpu.vector_store %arg23[%c0_109, %c0_110], %185 {strides = array<i32>} : memref<1x1xf32, #tpu.memory_space<vmem>>, vector<1x1xf32>,
    return
  }
}

</mosaic_0001>

<llo_original>
// kernel: pyg_tree_vae_forward.1
$region0: #{pyg_tree_vae_forward.1}
  #allocation0 [shape = 'u32[]', space=smem, size = 0x4, offset = 0x4, fixed_abs, tag = 'smem constant byte address 0x4 - core index']
  #allocation1 [shape = 'u32[144,128]{1,0:T(1,128)}', space=vmem, size = 0x12000, scoped, tag = 'internal scratch']
  %s0 = inlined_call_operand.vmem [shape: f32[8,1024], index: 0, kind: input, shape index: {}]
  %s1 = inlined_call_operand.vmem [shape: bf16[1024,128], index: 1, kind: input, shape index: {}]
  %s2 = inlined_call_operand.hbm [shape: f32[1,128], index: 2, kind: input, shape index: {}]
  %s3 = inlined_call_operand.vmem [shape: bf16[2,128,128], index: 3, kind: input, shape index: {}]
  %s4 = inlined_call_operand.vmem [shape: f32[2,1,128], index: 4, kind: input, shape index: {}]
  %s5 = inlined_call_operand.vmem [shape: bf16[2,128,128], index: 5, kind: input, shape index: {}]
  %s6 = inlined_call_operand.vmem [shape: f32[2,1,128], index: 6, kind: input, shape index: {}]
  %s7 = inlined_call_operand.vmem [shape: bf16[128,128], index: 7, kind: input, shape index: {}]
  %s8 = inlined_call_operand.hbm [shape: f32[1,128], index: 8, kind: input, shape index: {}]
  %s9 = inlined_call_operand.vmem [shape: bf16[128,128], index: 9, kind: input, shape index: {}]
  %s10 = inlined_call_operand.hbm [shape: f32[1,128], index: 10, kind: input, shape index: {}]
  %s11 = inlined_call_operand.vmem [shape: bf16[2,128,128], index: 11, kind: input, shape index: {}]
  %s12 = inlined_call_operand.hbm [shape: f32[2,1,128], index: 12, kind: input, shape index: {}]
  %s13 = inlined_call_operand.vmem [shape: f32[3,8,1], index: 13, kind: input, shape index: {}]
  %s14 = inlined_call_operand.vmem [shape: f32[1,128], index: 14, kind: input, shape index: {}]
  %s15 = inlined_call_operand.hbm [shape: bf16[128,128], index: 15, kind: input, shape index: {}]
  %s16 = inlined_call_operand.hbm [shape: f32[1,128], index: 16, kind: input, shape index: {}]
  %s17 = inlined_call_operand.vmem [shape: bf16[128,1024], index: 17, kind: input, shape index: {}]
  %s18 = inlined_call_operand.vmem [shape: f32[1,1024], index: 18, kind: input, shape index: {}]
  %s19 = inlined_call_operand.vmem [shape: f32[8,1024], index: 19, kind: output, shape index: {0}]
  %s20 = inlined_call_operand.hbm [shape: f32[8,128], index: 20, kind: output, shape index: {1}]
  %s21 = inlined_call_operand.hbm [shape: f32[1,128], index: 21, kind: output, shape index: {2}]
  %s22 = inlined_call_operand.hbm [shape: f32[1,1], index: 22, kind: output, shape index: {3}]
  %s23 = inlined_call_operand.hbm [shape: f32[1,1], index: 23, kind: output, shape index: {4}]
  %24 = xla_tuple %s19, %s20, %s21, %s22, %s23
  %s25 = sld [smem:[#allocation0]]
  $region142: #{pyg_tree_vae_forward.1} parent=0
    _
  %s27 = ssub.s32 1, %s25
  %s28 = scalar_select 0, %s27, %s25
  $region1: #{pyg_tree_vae_forward.1} parent=0
    #allocation2 [shape = 'u8[512]{0}', space=vmem, size = 0x400, scoped, tag = 'input window, operand 2, single buffered']
    #allocation3 [shape = 's32[1]{0}', space=sflag, size = 0x4, scoped, tag = 'scoped memory for pyg_tree_vae_forward.1']
    #allocation4 [shape = 's32[1]{0}', space=sflag, size = 0x4, scoped, tag = 'scoped memory for pyg_tree_vae_forward.1']
    #allocation5 [shape = 'u8[512]{0}', space=vmem, size = 0x400, scoped, tag = 'input window, operand 8, single buffered']
    #allocation6 [shape = 's32[1]{0}', space=sflag, size = 0x4, scoped, tag = 'scoped memory for pyg_tree_vae_forward.1']
    #allocation7 [shape = 'u8[512]{0}', space=vmem, size = 0x400, scoped, tag = 'input window, operand 10, single buffered']
    #allocation8 [shape = 'u8[1024]{0}', space=vmem, size = 0x400, scoped, tag = 'input window, operand 12, single buffered']
    #allocation9 [shape = 's32[1]{0}', space=sflag, size = 0x4, scoped, tag = 'scoped memory for pyg_tree_vae_forward.1']
    #allocation10 [shape = 'u8[32768]{0}', space=vmem, size = 0x8000, scoped, tag = 'input window, operand 15, single buffered']
    #allocation11 [shape = 'u8[512]{0}', space=vmem, size = 0x400, scoped, tag = 'input window, operand 16, single buffered']
    #allocation12 [shape = 's32[1]{0}', space=sflag, size = 0x4, scoped, tag = 'scoped memory for pyg_tree_vae_forward.1']
    #allocation13 [shape = 'u8[4096]{0}', space=vmem, size = 0x1000, scoped, tag = 'output window, operand 1, single buffered']
    #allocation14 [shape = 'u8[512]{0}', space=vmem, size = 0x400, scoped, tag = 'output window, operand 2, single buffered']
    #allocation15 [shape = 's32[1]{0}', space=sflag, size = 0x4, scoped, tag = 'scoped memory for pyg_tree_vae_forward.1']
    #allocation16 [shape = 'u8[512]{0}', space=vmem, size = 0x400, scoped, tag = 'output window, operand 3, single buffered']
    #allocation17 [shape = 'u8[512]{0}', space=vmem, size = 0x400, scoped, tag = 'output window, operand 4, single buffered']
    #allocation18 [shape = 's32[1]{0}', space=sflag, size = 0x4, scoped, tag = 'scoped memory for pyg_tree_vae_forward.1']
    %29 = vsyncpa [#allocation3], 0
    %30 = vsyncpa [#allocation6], 0
    %31 = vsyncpa [#allocation9], 0
    %32 = vsyncpa [#allocation12], 0
    %33 = vsyncpa [#allocation4], 0
    %34 = vsyncpa [#allocation15], 0
    %35 = vsyncpa [#allocation18], 0
    // Predicated region
    $region2: #{pyg_tree_vae_forward.1} parent=1 // pred_check
      _
    $region3: #{pyg_tree_vae_forward.1} parent=1 // pred_check_branch
      %37 = sbr.rel (0) target = $region5
    $region4: #{pyg_tree_vae_forward.1} parent=1 // pred_region
      _
    $region5: #{pyg_tree_vae_forward.1} parent=1 // pred_fallthru
      _
    // Predicated region
    $region6: #{pyg_tree_vae_forward.1} parent=1 // pred_check
      _
    $region7: #{pyg_tree_vae_forward.1} parent=1 // pred_check_branch
      %39 = sbr.rel (0) target = $region9
    $region8: #{pyg_tree_vae_forward.1} parent=1 // pred_region
      _
    $region9: #{pyg_tree_vae_forward.1} parent=1 // pred_fallthru
      _
    // Predicated region
    $region10: #{pyg_tree_vae_forward.1} parent=1 // pred_check
      _
    $region11: #{pyg_tree_vae_forward.1} parent=1 // pred_check_branch
      %41 = sbr.rel (0) target = $region13
    $region12: #{pyg_tree_vae_forward.1} parent=1 // pred_region
      %s43 = ssub.s32 16, 16
      %44 = vsyncadd [#allocation3], %s43
      %s46 = sshll.u32 [#allocation2], 4
      %s47 = int_to_ptr.vmem [resolvable:$true] %s46
      %49 = dma.hbm_to_vmem [thread:$0]  %s2, 16, %s47, [#allocation3]
    $region13: #{pyg_tree_vae_forward.1} parent=1 // pred_fallthru
      _
    // Predicated region
    $region14: #{pyg_tree_vae_forward.1} parent=1 // pred_check
      _
    $region15: #{pyg_tree_vae_forward.1} parent=1 // pred_check_branch
      %51 = sbr.rel (0) target = $region17
    $region16: #{pyg_tree_vae_forward.1} parent=1 // pred_region
      _
    $region17: #{pyg_tree_vae_forward.1} parent=1 // pred_fallthru
      _
    // Predicated region
    $region18: #{pyg_tree_vae_forward.1} parent=1 // pred_check
      _
    $region19: #{pyg_tree_vae_forward.1} parent=1 // pred_check_branch
      %53 = sbr.rel (0) target = $region21
    $region20: #{pyg_tree_vae_forward.1} parent=1 // pred_region
      _
    $region21: #{pyg_tree_vae_forward.1} parent=1 // pred_fallthru
      _
    // Predicated region
    $region22: #{pyg_tree_vae_forward.1} parent=1 // pred_check
      _
    $region23: #{pyg_tree_vae_forward.1} parent=1 // pred_check_branch
      %55 = sbr.rel (0) target = $region25
    $region24: #{pyg_tree_vae_forward.1} parent=1 // pred_region
      _
    $region25: #{pyg_tree_vae_forward.1} parent=1 // pred_fallthru
      _
    // Predicated region
    $region26: #{pyg_tree_vae_forward.1} parent=1 // pred_check
      _
    $region27: #{pyg_tree_vae_forward.1} parent=1 // pred_check_branch
      %57 = sbr.rel (0) target = $region29
    $region28: #{pyg_tree_vae_forward.1} parent=1 // pred_region
      _
    $region29: #{pyg_tree_vae_forward.1} parent=1 // pred_fallthru
      _
    // Predicated region
    $region30: #{pyg_tree_vae_forward.1} parent=1 // pred_check
      _
    $region31: #{pyg_tree_vae_forward.1} parent=1 // pred_check_branch
      %59 = sbr.rel (0) target = $region33
    $region32: #{pyg_tree_vae_forward.1} parent=1 // pred_region
      _
    $region33: #{pyg_tree_vae_forward.1} parent=1 // pred_fallthru
      _
    // Predicated region
    $region34: #{pyg_tree_vae_forward.1} parent=1 // pred_check
      _
    $region35: #{pyg_tree_vae_forward.1} parent=1 // pred_check_branch
      %61 = sbr.rel (0) target = $region37
    $region36: #{pyg_tree_vae_forward.1} parent=1 // pred_region
      %s63 = ssub.s32 16, 16
      %64 = vsyncadd [#allocation6], %s63
      %s66 = sshll.u32 [#allocation5], 4
      %s67 = int_to_ptr.vmem [resolvable:$true] %s66
      %69 = dma.hbm_to_vmem [thread:$0]  %s8, 16, %s67, [#allocation6]
    $region37: #{pyg_tree_vae_forward.1} parent=1 // pred_fallthru
      _
    // Predicated region
    $region38: #{pyg_tree_vae_forward.1} parent=1 // pred_check
      _
    $region39: #{pyg_tree_vae_forward.1} parent=1 // pred_check_branch
      %71 = sbr.rel (0) target = $region41
    $region40: #{pyg_tree_vae_forward.1} parent=1 // pred_region
      _
    $region41: #{pyg_tree_vae_forward.1} parent=1 // pred_fallthru
      _
    // Predicated region
    $region42: #{pyg_tree_vae_forward.1} parent=1 // pred_check
      _
    $region43: #{pyg_tree_vae_forward.1} parent=1 // pred_check_branch
      %73 = sbr.rel (0) target = $region45
    $region44: #{pyg_tree_vae_forward.1} parent=1 // pred_region
      %s75 = ssub.s32 16, 16
      %76 = vsyncadd [#allocation6], %s75
      %s78 = sshll.u32 [#allocation7], 4
      %s79 = int_to_ptr.vmem [resolvable:$true] %s78
      %81 = dma.hbm_to_vmem [thread:$0]  %s10, 16, %s79, [#allocation6]
    $region45: #{pyg_tree_vae_forward.1} parent=1 // pred_fallthru
      _
    // Predicated region
    $region46: #{pyg_tree_vae_forward.1} parent=1 // pred_check
      _
    $region47: #{pyg_tree_vae_forward.1} parent=1 // pred_check_branch
      %83 = sbr.rel (0) target = $region49
    $region48: #{pyg_tree_vae_forward.1} parent=1 // pred_region
      _
    $region49: #{pyg_tree_vae_forward.1} parent=1 // pred_fallthru
      _
    // Predicated region
    $region50: #{pyg_tree_vae_forward.1} parent=1 // pred_check
      _
    $region51: #{pyg_tree_vae_forward.1} parent=1 // pred_check_branch
      %85 = sbr.rel (0) target = $region53
    $region52: #{pyg_tree_vae_forward.1} parent=1 // pred_region
      %s87 = ssub.s32 32, 32
      %88 = vsyncadd [#allocation9], %s87
      %s89 = sshll.u32 [#allocation8], 4
      %s90 = int_to_ptr.vmem [resolvable:$true] %s89
      %95 = dma.hbm_to_vmem [thread:$0]  %s12, 32, %s90, [#allocation9], 16, 16, 1
    $region53: #{pyg_tree_vae_forward.1} parent=1 // pred_fallthru
      _
    // Predicated region
    $region54: #{pyg_tree_vae_forward.1} parent=1 // pred_check
      _
    $region55: #{pyg_tree_vae_forward.1} parent=1 // pred_check_branch
      %97 = sbr.rel (0) target = $region57
    $region56: #{pyg_tree_vae_forward.1} parent=1 // pred_region
      _
    $region57: #{pyg_tree_vae_forward.1} parent=1 // pred_fallthru
      _
    // Predicated region
    $region58: #{pyg_tree_vae_forward.1} parent=1 // pred_check
      _
    $region59: #{pyg_tree_vae_forward.1} parent=1 // pred_check_branch
      %99 = sbr.rel (0) target = $region61
    $region60: #{pyg_tree_vae_forward.1} parent=1 // pred_region
      _
    $region61: #{pyg_tree_vae_forward.1} parent=1 // pred_fallthru
      _
    // Predicated region
    $region62: #{pyg_tree_vae_forward.1} parent=1 // pred_check
      _
    $region63: #{pyg_tree_vae_forward.1} parent=1 // pred_check_branch
      %101 = sbr.rel (0) target = $region65
    $region64: #{pyg_tree_vae_forward.1} parent=1 // pred_region
      %s103 = ssub.s32 1024, 1024
      %104 = vsyncadd [#allocation9], %s103
      %s105 = sshll.u32 [#allocation10], 4
      %s106 = int_to_ptr.vmem [resolvable:$true] %s105
      %111 = dma.hbm_to_vmem [thread:$0]  %s15, 1024, %s106, [#allocation9], 64, 64, 4
    $region65: #{pyg_tree_vae_forward.1} parent=1 // pred_fallthru
      _
    // Predicated region
    $region66: #{pyg_tree_vae_forward.1} parent=1 // pred_check
      _
    $region67: #{pyg_tree_vae_forward.1} parent=1 // pred_check_branch
      %113 = sbr.rel (0) target = $region69
    $region68: #{pyg_tree_vae_forward.1} parent=1 // pred_region
      %s115 = ssub.s32 16, 16
      %116 = vsyncadd [#allocation12], %s115
      %s118 = sshll.u32 [#allocation11], 4
      %s119 = int_to_ptr.vmem [resolvable:$true] %s118
      %121 = dma.hbm_to_vmem [thread:$0]  %s16, 16, %s119, [#allocation12]
    $region69: #{pyg_tree_vae_forward.1} parent=1 // pred_fallthru
      _
    // Predicated region
    $region70: #{pyg_tree_vae_forward.1} parent=1 // pred_check
      _
    $region71: #{pyg_tree_vae_forward.1} parent=1 // pred_check_branch
      %123 = sbr.rel (0) target = $region73
    $region72: #{pyg_tree_vae_forward.1} parent=1 // pred_region
      _
    $region73: #{pyg_tree_vae_forward.1} parent=1 // pred_fallthru
      _
    // Predicated region
    $region74: #{pyg_tree_vae_forward.1} parent=1 // pred_check
      _
    $region75: #{pyg_tree_vae_forward.1} parent=1 // pred_check_branch
      %125 = sbr.rel (0) target = $region77
    $region76: #{pyg_tree_vae_forward.1} parent=1 // pred_region
      _
    $region77: #{pyg_tree_vae_forward.1} parent=1 // pred_fallthru
      _
    // Predicated region
    $region78: #{pyg_tree_vae_forward.1} parent=1 // pred_check
      _
    $region79: #{pyg_tree_vae_forward.1} parent=1 // pred_check_branch
      %127 = sbr.rel (0) target = $region81
    $region80: #{pyg_tree_vae_forward.1} parent=1 // pred_region
      %128 = dma.done [#allocation3], 16
    $region81: #{pyg_tree_vae_forward.1} parent=1 // pred_fallthru
      _
    // Predicated region
    $region82: #{pyg_tree_vae_forward.1} parent=1 // pred_check
      _
    $region83: #{pyg_tree_vae_forward.1} parent=1 // pred_check_branch
      %130 = sbr.rel (0) target = $region85
    $region84: #{pyg_tree_vae_forward.1} parent=1 // pred_region
      %131 = dma.done [#allocation6], 16
    $region85: #{pyg_tree_vae_forward.1} parent=1 // pred_fallthru
      _
    // Predicated region
    $region86: #{pyg_tree_vae_forward.1} parent=1 // pred_check
      _
    $region87: #{pyg_tree_vae_forward.1} parent=1 // pred_check_branch
      %133 = sbr.rel (0) target = $region89
    $region88: #{pyg_tree_vae_forward.1} parent=1 // pred_region
      %134 = dma.done [#allocation6], 16
    $region89: #{pyg_tree_vae_forward.1} parent=1 // pred_fallthru
      _
    // Predicated region
    $region90: #{pyg_tree_vae_forward.1} parent=1 // pred_check
      _
    $region91: #{pyg_tree_vae_forward.1} parent=1 // pred_check_branch
      %136 = sbr.rel (0) target = $region93
    $region92: #{pyg_tree_vae_forward.1} parent=1 // pred_region
      %137 = dma.done [#allocation9], 32
    $region93: #{pyg_tree_vae_forward.1} parent=1 // pred_fallthru
      _
    // Predicated region
    $region94: #{pyg_tree_vae_forward.1} parent=1 // pred_check
      _
    $region95: #{pyg_tree_vae_forward.1} parent=1 // pred_check_branch
      %139 = sbr.rel (0) target = $region97
    $region96: #{pyg_tree_vae_forward.1} parent=1 // pred_region
      %140 = dma.done [#allocation9], 1024
    $region97: #{pyg_tree_vae_forward.1} parent=1 // pred_fallthru
      _
    // Predicated region
    $region98: #{pyg_tree_vae_forward.1} parent=1 // pred_check
      _
    $region99: #{pyg_tree_vae_forward.1} parent=1 // pred_check_branch
      %142 = sbr.rel (0) target = $region101
    $region100: #{pyg_tree_vae_forward.1} parent=1 // pred_region
      %143 = dma.done [#allocation12], 16
    $region101: #{pyg_tree_vae_forward.1} parent=1 // pred_fallthru
      _
    %v145 = vld [vmem:[%s0] sm:$0xff]
    %v146 = vld [vmem:[%s0 + $0x8] sm:$0xff]
    %v147 = vld [vmem:[%s0 + $0x10] sm:$0xff]
    %v148 = vld [vmem:[%s0 + $0x18] sm:$0xff]
    %v149 = vld [vmem:[%s0 + $0x20] sm:$0xff]
    %v150 = vld [vmem:[%s0 + $0x28] sm:$0xff]
    %v151 = vld [vmem:[%s0 + $0x30] sm:$0xff]
    %v152 = vld [vmem:[%s0 + $0x38] sm:$0xff]
    %v153 = vpack.c.bf16 %v145, %v145
    %v154 = vpack.c.bf16 %v146, %v146
    %v155 = vpack.c.bf16 %v147, %v147
    %v156 = vpack.c.bf16 %v148, %v148
    %v157 = vpack.c.bf16 %v149, %v149
    %v158 = vpack.c.bf16 %v150, %v150
    %v159 = vpack.c.bf16 %v151, %v151
    %v160 = vpack.c.bf16 %v152, %v152
    %v161 = vld [vmem:[%s1] sm:$0xf]
    %v162 = vld [vmem:[%s1 + $0x4] sm:$0xf]
    %v163 = vld [vmem:[%s1 + $0x8] sm:$0xf]
    %v164 = vld [vmem:[%s1 + $0xc] sm:$0xf]
    %v165 = vld [vmem:[%s1 + $0x10] sm:$0xf]
    %v166 = vld [vmem:[%s1 + $0x14] sm:$0xf]
    %v167 = vld [vmem:[%s1 + $0x18] sm:$0xf]
    %v168 = vld [vmem:[%s1 + $0x1c] sm:$0xf]
    %v169 = vld [vmem:[%s1 + $0x20] sm:$0xf]
    %v170 = vld [vmem:[%s1 + $0x24] sm:$0xf]
    %v171 = vld [vmem:[%s1 + $0x28] sm:$0xf]
    %v172 = vld [vmem:[%s1 + $0x2c] sm:$0xf]
    %v173 = vld [vmem:[%s1 + $0x30] sm:$0xf]
    %v174 = vld [vmem:[%s1 + $0x34] sm:$0xf]
    %v175 = vld [vmem:[%s1 + $0x38] sm:$0xf]
    %v176 = vld [vmem:[%s1 + $0x3c] sm:$0xf]
    %v177 = vld [vmem:[%s1 + $0x40] sm:$0xf]
    %v178 = vld [vmem:[%s1 + $0x44] sm:$0xf]
    %v179 = vld [vmem:[%s1 + $0x48] sm:$0xf]
    %v180 = vld [vmem:[%s1 + $0x4c] sm:$0xf]
    %v181 = vld [vmem:[%s1 + $0x50] sm:$0xf]
    %v182 = vld [vmem:[%s1 + $0x54] sm:$0xf]
    %v183 = vld [vmem:[%s1 + $0x58] sm:$0xf]
    %v184 = vld [vmem:[%s1 + $0x5c] sm:$0xf]
    %v185 = vld [vmem:[%s1 + $0x60] sm:$0xf]
    %v186 = vld [vmem:[%s1 + $0x64] sm:$0xf]
    %v187 = vld [vmem:[%s1 + $0x68] sm:$0xf]
    %v188 = vld [vmem:[%s1 + $0x6c] sm:$0xf]
    %v189 = vld [vmem:[%s1 + $0x70] sm:$0xf]
    %v190 = vld [vmem:[%s1 + $0x74] sm:$0xf]
    %v191 = vld [vmem:[%s1 + $0x78] sm:$0xf]
    %v192 = vld [vmem:[%s1 + $0x7c] sm:$0xf]
    %v193 = vld [vmem:[%s1 + $0x80] sm:$0xf]
    %v194 = vld [vmem:[%s1 + $0x84] sm:$0xf]
    %v195 = vld [vmem:[%s1 + $0x88] sm:$0xf]
    %v196 = vld [vmem:[%s1 + $0x8c] sm:$0xf]
    %v197 = vld [vmem:[%s1 + $0x90] sm:$0xf]
    %v198 = vld [vmem:[%s1 + $0x94] sm:$0xf]
    %v199 = vld [vmem:[%s1 + $0x98] sm:$0xf]
    %v200 = vld [vmem:[%s1 + $0x9c] sm:$0xf]
    %v201 = vld [vmem:[%s1 + $0xa0] sm:$0xf]
    %v202 = vld [vmem:[%s1 + $0xa4] sm:$0xf]
    %v203 = vld [vmem:[%s1 + $0xa8] sm:$0xf]
    %v204 = vld [vmem:[%s1 + $0xac] sm:$0xf]
    %v205 = vld [vmem:[%s1 + $0xb0] sm:$0xf]
    %v206 = vld [vmem:[%s1 + $0xb4] sm:$0xf]
    %v207 = vld [vmem:[%s1 + $0xb8] sm:$0xf]
    %v208 = vld [vmem:[%s1 + $0xbc] sm:$0xf]
    %v209 = vld [vmem:[%s1 + $0xc0] sm:$0xf]
    %v210 = vld [vmem:[%s1 + $0xc4] sm:$0xf]
    %v211 = vld [vmem:[%s1 + $0xc8] sm:$0xf]
    %v212 = vld [vmem:[%s1 + $0xcc] sm:$0xf]
    %v213 = vld [vmem:[%s1 + $0xd0] sm:$0xf]
    %v214 = vld [vmem:[%s1 + $0xd4] sm:$0xf]
    %v215 = vld [vmem:[%s1 + $0xd8] sm:$0xf]
    %v216 = vld [vmem:[%s1 + $0xdc] sm:$0xf]
    %v217 = vld [vmem:[%s1 + $0xe0] sm:$0xf]
    %v218 = vld [vmem:[%s1 + $0xe4] sm:$0xf]
    %v219 = vld [vmem:[%s1 + $0xe8] sm:$0xf]
    %v220 = vld [vmem:[%s1 + $0xec] sm:$0xf]
    %v221 = vld [vmem:[%s1 + $0xf0] sm:$0xf]
    %v222 = vld [vmem:[%s1 + $0xf4] sm:$0xf]
    %v223 = vld [vmem:[%s1 + $0xf8] sm:$0xf]
    %v224 = vld [vmem:[%s1 + $0xfc] sm:$0xf]
    %v225 = vld [vmem:[%s1 + $0x100] sm:$0xf]
    %v226 = vld [vmem:[%s1 + $0x104] sm:$0xf]
    %v227 = vld [vmem:[%s1 + $0x108] sm:$0xf]
    %v228 = vld [vmem:[%s1 + $0x10c] sm:$0xf]
    %v229 = vld [vmem:[%s1 + $0x110] sm:$0xf]
    %v230 = vld [vmem:[%s1 + $0x114] sm:$0xf]
    %v231 = vld [vmem:[%s1 + $0x118] sm:$0xf]
    %v232 = vld [vmem:[%s1 + $0x11c] sm:$0xf]
    %v233 = vld [vmem:[%s1 + $0x120] sm:$0xf]
    %v234 = vld [vmem:[%s1 + $0x124] sm:$0xf]
    %v235 = vld [vmem:[%s1 + $0x128] sm:$0xf]
    %v236 = vld [vmem:[%s1 + $0x12c] sm:$0xf]
    %v237 = vld [vmem:[%s1 + $0x130] sm:$0xf]
    %v238 = vld [vmem:[%s1 + $0x134] sm:$0xf]
    %v239 = vld [vmem:[%s1 + $0x138] sm:$0xf]
    %v240 = vld [vmem:[%s1 + $0x13c] sm:$0xf]
    %v241 = vld [vmem:[%s1 + $0x140] sm:$0xf]
    %v242 = vld [vmem:[%s1 + $0x144] sm:$0xf]
    %v243 = vld [vmem:[%s1 + $0x148] sm:$0xf]
    %v244 = vld [vmem:[%s1 + $0x14c] sm:$0xf]
    %v245 = vld [vmem:[%s1 + $0x150] sm:$0xf]
    %v246 = vld [vmem:[%s1 + $0x154] sm:$0xf]
    %v247 = vld [vmem:[%s1 + $0x158] sm:$0xf]
    %v248 = vld [vmem:[%s1 + $0x15c] sm:$0xf]
    %v249 = vld [vmem:[%s1 + $0x160] sm:$0xf]
    %v250 = vld [vmem:[%s1 + $0x164] sm:$0xf]
    %v251 = vld [vmem:[%s1 + $0x168] sm:$0xf]
    %v252 = vld [vmem:[%s1 + $0x16c] sm:$0xf]
    %v253 = vld [vmem:[%s1 + $0x170] sm:$0xf]
    %v254 = vld [vmem:[%s1 + $0x174] sm:$0xf]
    %v255 = vld [vmem:[%s1 + $0x178] sm:$0xf]
    %v256 = vld [vmem:[%s1 + $0x17c] sm:$0xf]
    %v257 = vld [vmem:[%s1 + $0x180] sm:$0xf]
    %v258 = vld [vmem:[%s1 + $0x184] sm:$0xf]
    %v259 = vld [vmem:[%s1 + $0x188] sm:$0xf]
    %v260 = vld [vmem:[%s1 + $0x18c] sm:$0xf]
    %v261 = vld [vmem:[%s1 + $0x190] sm:$0xf]
    %v262 = vld [vmem:[%s1 + $0x194] sm:$0xf]
    %v263 = vld [vmem:[%s1 + $0x198] sm:$0xf]
    %v264 = vld [vmem:[%s1 + $0x19c] sm:$0xf]
    %v265 = vld [vmem:[%s1 + $0x1a0] sm:$0xf]
    %v266 = vld [vmem:[%s1 + $0x1a4] sm:$0xf]
    %v267 = vld [vmem:[%s1 + $0x1a8] sm:$0xf]
    %v268 = vld [vmem:[%s1 + $0x1ac] sm:$0xf]
    %v269 = vld [vmem:[%s1 + $0x1b0] sm:$0xf]
    %v270 = vld [vmem:[%s1 + $0x1b4] sm:$0xf]
    %v271 = vld [vmem:[%s1 + $0x1b8] sm:$0xf]
    %v272 = vld [vmem:[%s1 + $0x1bc] sm:$0xf]
    %v273 = vld [vmem:[%s1 + $0x1c0] sm:$0xf]
    %v274 = vld [vmem:[%s1 + $0x1c4] sm:$0xf]
    %v275 = vld [vmem:[%s1 + $0x1c8] sm:$0xf]
    %v276 = vld [vmem:[%s1 + $0x1cc] sm:$0xf]
    %v277 = vld [vmem:[%s1 + $0x1d0] sm:$0xf]
    %v278 = vld [vmem:[%s1 + $0x1d4] sm:$0xf]
    %v279 = vld [vmem:[%s1 + $0x1d8] sm:$0xf]
    %v280 = vld [vmem:[%s1 + $0x1dc] sm:$0xf]
    %v281 = vld [vmem:[%s1 + $0x1e0] sm:$0xf]
    %v282 = vld [vmem:[%s1 + $0x1e4] sm:$0xf]
    %v283 = vld [vmem:[%s1 + $0x1e8] sm:$0xf]
    %v284 = vld [vmem:[%s1 + $0x1ec] sm:$0xf]
    %v285 = vld [vmem:[%s1 + $0x1f0] sm:$0xf]
    %v286 = vld [vmem:[%s1 + $0x1f4] sm:$0xf]
    %v287 = vld [vmem:[%s1 + $0x1f8] sm:$0xf]
    %v288 = vld [vmem:[%s1 + $0x1fc] sm:$0xf]
    %v289 = vld [vmem:[#allocation2] sm:$0x1]
    %v291 = vlaneseq
    %v292 = vshrl.u32 %v291, 7
    %v293 = vsub.s32 0, %v292
    %v294 = vrot.slane %v289, %v293
    %v424 = vunpack.c.l.b16 %v161
    %v425 = vunpack.c.l.b16 %v162
    %v426 = vunpack.c.l.b16 %v163
    %v427 = vunpack.c.l.b16 %v164
    %v428 = vunpack.c.l.b16 %v165
    %v429 = vunpack.c.l.b16 %v166
    %v430 = vunpack.c.l.b16 %v167
    %v431 = vunpack.c.l.b16 %v168
    %v432 = vunpack.c.l.b16 %v169
    %v433 = vunpack.c.l.b16 %v170
    %v434 = vunpack.c.l.b16 %v171
    %v435 = vunpack.c.l.b16 %v172
    %v436 = vunpack.c.l.b16 %v173
    %v437 = vunpack.c.l.b16 %v174
    %v438 = vunpack.c.l.b16 %v175
    %v439 = vunpack.c.l.b16 %v176
    %v440 = vunpack.c.l.b16 %v177
    %v441 = vunpack.c.l.b16 %v178
    %v442 = vunpack.c.l.b16 %v179
    %v443 = vunpack.c.l.b16 %v180
    %v444 = vunpack.c.l.b16 %v181
    %v445 = vunpack.c.l.b16 %v182
    %v446 = vunpack.c.l.b16 %v183
    %v447 = vunpack.c.l.b16 %v184
    %v448 = vunpack.c.l.b16 %v185
    %v449 = vunpack.c.l.b16 %v186
    %v450 = vunpack.c.l.b16 %v187
    %v451 = vunpack.c.l.b16 %v188
    %v452 = vunpack.c.l.b16 %v189
    %v453 = vunpack.c.l.b16 %v190
    %v454 = vunpack.c.l.b16 %v191
    %v455 = vunpack.c.l.b16 %v192
    %v456 = vunpack.c.l.b16 %v193
    %v457 = vunpack.c.l.b16 %v194
    %v458 = vunpack.c.l.b16 %v195
    %v459 = vunpack.c.l.b16 %v196
    %v460 = vunpack.c.l.b16 %v197
    %v461 = vunpack.c.l.b16 %v198
    %v462 = vunpack.c.l.b16 %v199
    %v463 = vunpack.c.l.b16 %v200
    %v464 = vunpack.c.l.b16 %v201
    %v465 = vunpack.c.l.b16 %v202
    %v466 = vunpack.c.l.b16 %v203
    %v467 = vunpack.c.l.b16 %v204
    %v468 = vunpack.c.l.b16 %v205
    %v469 = vunpack.c.l.b16 %v206
    %v470 = vunpack.c.l.b16 %v207
    %v471 = vunpack.c.l.b16 %v208
    %v472 = vunpack.c.l.b16 %v209
    %v473 = vunpack.c.l.b16 %v210
    %v474 = vunpack.c.l.b16 %v211
    %v475 = vunpack.c.l.b16 %v212
    %v476 = vunpack.c.l.b16 %v213
    %v477 = vunpack.c.l.b16 %v214
    %v478 = vunpack.c.l.b16 %v215
    %v479 = vunpack.c.l.b16 %v216
    %v480 = vunpack.c.l.b16 %v217
    %v481 = vunpack.c.l.b16 %v218
    %v482 = vunpack.c.l.b16 %v219
    %v483 = vunpack.c.l.b16 %v220
    %v484 = vunpack.c.l.b16 %v221
    %v485 = vunpack.c.l.b16 %v222
    %v486 = vunpack.c.l.b16 %v223
    %v487 = vunpack.c.l.b16 %v224
    %v488 = vunpack.c.l.b16 %v225
    %v489 = vunpack.c.l.b16 %v226
    %v490 = vunpack.c.l.b16 %v227
    %v491 = vunpack.c.l.b16 %v228
    %v492 = vunpack.c.l.b16 %v229
    %v493 = vunpack.c.l.b16 %v230
    %v494 = vunpack.c.l.b16 %v231
    %v495 = vunpack.c.l.b16 %v232
    %v496 = vunpack.c.l.b16 %v233
    %v497 = vunpack.c.l.b16 %v234
    %v498 = vunpack.c.l.b16 %v235
    %v499 = vunpack.c.l.b16 %v236
    %v500 = vunpack.c.l.b16 %v237
    %v501 = vunpack.c.l.b16 %v238
    %v502 = vunpack.c.l.b16 %v239
    %v503 = vunpack.c.l.b16 %v240
    %v504 = vunpack.c.l.b16 %v241
    %v505 = vunpack.c.l.b16 %v242
    %v506 = vunpack.c.l.b16 %v243
    %v507 = vunpack.c.l.b16 %v244
    %v508 = vunpack.c.l.b16 %v245
    %v509 = vunpack.c.l.b16 %v246
    %v510 = vunpack.c.l.b16 %v247
    %v511 = vunpack.c.l.b16 %v248
    %v512 = vunpack.c.l.b16 %v249
    %v513 = vunpack.c.l.b16 %v250
    %v514 = vunpack.c.l.b16 %v251
    %v515 = vunpack.c.l.b16 %v252
    %v516 = vunpack.c.l.b16 %v253
    %v517 = vunpack.c.l.b16 %v254
    %v518 = vunpack.c.l.b16 %v255
    %v519 = vunpack.c.l.b16 %v256
    %v520 = vunpack.c.l.b16 %v257
    %v521 = vunpack.c.l.b16 %v258
    %v522 = vunpack.c.l.b16 %v259
    %v523 = vunpack.c.l.b16 %v260
    %v524 = vunpack.c.l.b16 %v261
    %v525 = vunpack.c.l.b16 %v262
    %v526 = vunpack.c.l.b16 %v263
    %v527 = vunpack.c.l.b16 %v264
    %v528 = vunpack.c.l.b16 %v265
    %v529 = vunpack.c.l.b16 %v266
    %v530 = vunpack.c.l.b16 %v267
    %v531 = vunpack.c.l.b16 %v268
    %v532 = vunpack.c.l.b16 %v269
    %v533 = vunpack.c.l.b16 %v270
    %v534 = vunpack.c.l.b16 %v271
    %v535 = vunpack.c.l.b16 %v272
    %v536 = vunpack.c.l.b16 %v273
    %v537 = vunpack.c.l.b16 %v274
    %v538 = vunpack.c.l.b16 %v275
    %v539 = vunpack.c.l.b16 %v276
    %v540 = vunpack.c.l.b16 %v277
    %v541 = vunpack.c.l.b16 %v278
    %v542 = vunpack.c.l.b16 %v279
    %v543 = vunpack.c.l.b16 %v280
    %v544 = vunpack.c.l.b16 %v281
    %v545 = vunpack.c.l.b16 %v282
    %v546 = vunpack.c.l.b16 %v283
    %v547 = vunpack.c.l.b16 %v284
    %v548 = vunpack.c.l.b16 %v285
    %v549 = vunpack.c.l.b16 %v286
    %v550 = vunpack.c.l.b16 %v287
    %v551 = vunpack.c.l.b16 %v288
    %v552 = vpack.c.b16 %v425, %v424
    %v553 = vpack.c.b16 %v427, %v426
    %v554 = vpack.c.b16 %v429, %v428
    %v555 = vpack.c.b16 %v431, %v430
    %v556 = vpack.c.b16 %v433, %v432
    %v557 = vpack.c.b16 %v435, %v434
    %v558 = vpack.c.b16 %v437, %v436
    %v559 = vpack.c.b16 %v439, %v438
    %v560 = vpack.c.b16 %v441, %v440
    %v561 = vpack.c.b16 %v443, %v442
    %v562 = vpack.c.b16 %v445, %v444
    %v563 = vpack.c.b16 %v447, %v446
    %v564 = vpack.c.b16 %v449, %v448
    %v565 = vpack.c.b16 %v451, %v450
    %v566 = vpack.c.b16 %v453, %v452
    %v567 = vpack.c.b16 %v455, %v454
    %v568 = vpack.c.b16 %v457, %v456
    %v569 = vpack.c.b16 %v459, %v458
    %v570 = vpack.c.b16 %v461, %v460
    %v571 = vpack.c.b16 %v463, %v462
    %v572 = vpack.c.b16 %v465, %v464
    %v573 = vpack.c.b16 %v467, %v466
    %v574 = vpack.c.b16 %v469, %v468
    %v575 = vpack.c.b16 %v471, %v470
    %v576 = vpack.c.b16 %v473, %v472
    %v577 = vpack.c.b16 %v475, %v474
    %v578 = vpack.c.b16 %v477, %v476
    %v579 = vpack.c.b16 %v479, %v478
    %v580 = vpack.c.b16 %v481, %v480
    %v581 = vpack.c.b16 %v483, %v482
    %v582 = vpack.c.b16 %v485, %v484
    %v583 = vpack.c.b16 %v487, %v486
    %v584 = vpack.c.b16 %v489, %v488
    %v585 = vpack.c.b16 %v491, %v490
    %v586 = vpack.c.b16 %v493, %v492
    %v587 = vpack.c.b16 %v495, %v494
    %v588 = vpack.c.b16 %v497, %v496
    %v589 = vpack.c.b16 %v499, %v498
    %v590 = vpack.c.b16 %v501, %v500
    %v591 = vpack.c.b16 %v503, %v502
    %v592 = vpack.c.b16 %v505, %v504
    %v593 = vpack.c.b16 %v507, %v506
    %v594 = vpack.c.b16 %v509, %v508
    %v595 = vpack.c.b16 %v511, %v510
    %v596 = vpack.c.b16 %v513, %v512
    %v597 = vpack.c.b16 %v515, %v514
    %v598 = vpack.c.b16 %v517, %v516
    %v599 = vpack.c.b16 %v519, %v518
    %v600 = vpack.c.b16 %v521, %v520
    %v601 = vpack.c.b16 %v523, %v522
    %v602 = vpack.c.b16 %v525, %v524
    %v603 = vpack.c.b16 %v527, %v526
    %v604 = vpack.c.b16 %v529, %v528
    %v605 = vpack.c.b16 %v531, %v530
    %v606 = vpack.c.b16 %v533, %v532
    %v607 = vpack.c.b16 %v535, %v534
    %v608 = vpack.c.b16 %v537, %v536
    %v609 = vpack.c.b16 %v539, %v538
    %v610 = vpack.c.b16 %v541, %v540
    %v611 = vpack.c.b16 %v543, %v542
    %v612 = vpack.c.b16 %v545, %v544
    %v613 = vpack.c.b16 %v547, %v546
    %v614 = vpack.c.b16 %v549, %v548
    %v615 = vpack.c.b16 %v551, %v550
    %680 = vmatprep.subr.bf16.mxu0 0
    %681 = vmatpush1.bf16.msra.mxu0 %v552
    %682 = vmatprep.subr.bf16.mxu0 0
    %683 = vmatpush1.bf16.msra.mxu0 %v553
    %684 = vmatprep.subr.bf16.mxu0 0
    %685 = vmatpush1.bf16.msra.mxu0 %v554
    %686 = vmatprep.subr.bf16.mxu0 0
    %687 = vmatpush1.bf16.msra.mxu0 %v555
    %688 = vmatprep.subr.bf16.mxu0 0
    %689 = vmatpush1.bf16.msra.mxu0 %v556
    %690 = vmatprep.subr.bf16.mxu0 0
    %691 = vmatpush1.bf16.msra.mxu0 %v557
    %692 = vmatprep.subr.bf16.mxu0 0
    %693 = vmatpush1.bf16.msra.mxu0 %v558
    %694 = vmatprep.subr.bf16.mxu0 0
    %695 = vmatpush1.bf16.msra.mxu0 %v559
    %696 = vmatprep.subr.bf16.mxu0 0
    %697 = vmatpush1.bf16.msra.mxu0 %v560
    %698 = vmatprep.subr.bf16.mxu0 0
    %699 = vmatpush1.bf16.msra.mxu0 %v561
    %700 = vmatprep.subr.bf16.mxu0 0
    %701 = vmatpush1.bf16.msra.mxu0 %v562
    %702 = vmatprep.subr.bf16.mxu0 0
    %703 = vmatpush1.bf16.msra.mxu0 %v563
    %704 = vmatprep.subr.bf16.mxu0 0
    %705 = vmatpush1.bf16.msra.mxu0 %v564
    %706 = vmatprep.subr.bf16.mxu0 0
    %707 = vmatpush1.bf16.msra.mxu0 %v565
    %708 = vmatprep.subr.bf16.mxu0 0
    %709 = vmatpush1.bf16.msra.mxu0 %v566
    %710 = vmatprep.subr.bf16.mxu0 0
    %711 = vmatpush1.bf16.msra.mxu0 %v567
    %712 = vmatprep.mubr.bf16.mxu0 %v154
    %713 = vmatmul.mubr.bf16.gmra.mrb[0].mxu0 %v153
    %v714 = vpop.f32.mrb[0].mxu0
    %v715 = vadd.f32 %v294, %v714
    %v716 = vpop.f32.mrb[0].mxu0
    %v717 = vpop.f32.mrb[0].mxu0
    %v718 = vpop.f32.mrb[0].mxu0
    %719 = vdwg.mxu0
    %720 = vmatprep.subr.bf16.mxu0 0
    %721 = vmatpush1.bf16.msra.mxu0 %v568
    %722 = vmatprep.subr.bf16.mxu0 0
    %723 = vmatpush1.bf16.msra.mxu0 %v569
    %724 = vmatprep.subr.bf16.mxu0 0
    %725 = vmatpush1.bf16.msra.mxu0 %v570
    %726 = vmatprep.subr.bf16.mxu0 0
    %727 = vmatpush1.bf16.msra.mxu0 %v571
    %728 = vmatprep.subr.bf16.mxu0 0
    %729 = vmatpush1.bf16.msra.mxu0 %v572
    %730 = vmatprep.subr.bf16.mxu0 0
    %731 = vmatpush1.bf16.msra.mxu0 %v573
    %732 = vmatprep.subr.bf16.mxu0 0
    %733 = vmatpush1.bf16.msra.mxu0 %v574
    %734 = vmatprep.subr.bf16.mxu0 0
    %735 = vmatpush1.bf16.msra.mxu0 %v575
    %736 = vmatprep.subr.bf16.mxu0 0
    %737 = vmatpush1.bf16.msra.mxu0 %v576
    %738 = vmatprep.subr.bf16.mxu0 0
    %739 = vmatpush1.bf16.msra.mxu0 %v577
    %740 = vmatprep.subr.bf16.mxu0 0
    %741 = vmatpush1.bf16.msra.mxu0 %v578
    %742 = vmatprep.subr.bf16.mxu0 0
    %743 = vmatpush1.bf16.msra.mxu0 %v579
    %744 = vmatprep.subr.bf16.mxu0 0
    %745 = vmatpush1.bf16.msra.mxu0 %v580
    %746 = vmatprep.subr.bf16.mxu0 0
    %747 = vmatpush1.bf16.msra.mxu0 %v581
    %748 = vmatprep.subr.bf16.mxu0 0
    %749 = vmatpush1.bf16.msra.mxu0 %v582
    %750 = vmatprep.subr.bf16.mxu0 0
    %751 = vmatpush1.bf16.msra.mxu0 %v583
    %752 = vmatprep.mubr.bf16.mxu0 %v156
    %753 = vmatmul.mubr.bf16.gmra.mrb[0].mxu0 %v155
    %v754 = vpop.f32.mrb[0].mxu0
    %v755 = vadd.f32 %v715, %v754
    %v756 = vpop.f32.mrb[0].mxu0
    %v757 = vpop.f32.mrb[0].mxu0
    %v758 = vpop.f32.mrb[0].mxu0
    %759 = vdwg.mxu0
    %760 = vmatprep.subr.bf16.mxu0 0
    %761 = vmatpush1.bf16.msra.mxu0 %v584
    %762 = vmatprep.subr.bf16.mxu0 0
    %763 = vmatpush1.bf16.msra.mxu0 %v585
    %764 = vmatprep.subr.bf16.mxu0 0
    %765 = vmatpush1.bf16.msra.mxu0 %v586
    %766 = vmatprep.subr.bf16.mxu0 0
    %767 = vmatpush1.bf16.msra.mxu0 %v587
    %768 = vmatprep.subr.bf16.mxu0 0
    %769 = vmatpush1.bf16.msra.mxu0 %v588
    %770 = vmatprep.subr.bf16.mxu0 0
    %771 = vmatpush1.bf16.msra.mxu0 %v589
    %772 = vmatprep.subr.bf16.mxu0 0
    %773 = vmatpush1.bf16.msra.mxu0 %v590
    %774 = vmatprep.subr.bf16.mxu0 0
    %775 = vmatpush1.bf16.msra.mxu0 %v591
    %776 = vmatprep.subr.bf16.mxu0 0
    %777 = vmatpush1.bf16.msra.mxu0 %v592
    %778 = vmatprep.subr.bf16.mxu0 0
    %779 = vmatpush1.bf16.msra.mxu0 %v593
    %780 = vmatprep.subr.bf16.mxu0 0
    %781 = vmatpush1.bf16.msra.mxu0 %v594
    %782 = vmatprep.subr.bf16.mxu0 0
    %783 = vmatpush1.bf16.msra.mxu0 %v595
    %784 = vmatprep.subr.bf16.mxu0 0
    %785 = vmatpush1.bf16.msra.mxu0 %v596
    %786 = vmatprep.subr.bf16.mxu0 0
    %787 = vmatpush1.bf16.msra.mxu0 %v597
    %788 = vmatprep.subr.bf16.mxu0 0
    %789 = vmatpush1.bf16.msra.mxu0 %v598
    %790 = vmatprep.subr.bf16.mxu0 0
    %791 = vmatpush1.bf16.msra.mxu0 %v599
    %792 = vmatprep.mubr.bf16.mxu0 %v158
    %793 = vmatmul.mubr.bf16.gmra.mrb[0].mxu0 %v157
    %v794 = vpop.f32.mrb[0].mxu0
    %v795 = vadd.f32 %v755, %v794
    %v796 = vpop.f32.mrb[0].mxu0
    %v797 = vpop.f32.mrb[0].mxu0
    %v798 = vpop.f32.mrb[0].mxu0
    %799 = vdwg.mxu0
    %800 = vmatprep.subr.bf16.mxu0 0
    %801 = vmatpush1.bf16.msra.mxu0 %v600
    %802 = vmatprep.subr.bf16.mxu0 0
    %803 = vmatpush1.bf16.msra.mxu0 %v601
    %804 = vmatprep.subr.bf16.mxu0 0
    %805 = vmatpush1.bf16.msra.mxu0 %v602
    %806 = vmatprep.subr.bf16.mxu0 0
    %807 = vmatpush1.bf16.msra.mxu0 %v603
    %808 = vmatprep.subr.bf16.mxu0 0
    %809 = vmatpush1.bf16.msra.mxu0 %v604
    %810 = vmatprep.subr.bf16.mxu0 0
    %811 = vmatpush1.bf16.msra.mxu0 %v605
    %812 = vmatprep.subr.bf16.mxu0 0
    %813 = vmatpush1.bf16.msra.mxu0 %v606
    %814 = vmatprep.subr.bf16.mxu0 0
    %815 = vmatpush1.bf16.msra.mxu0 %v607
    %816 = vmatprep.subr.bf16.mxu0 0
    %817 = vmatpush1.bf16.msra.mxu0 %v608
    %818 = vmatprep.subr.bf16.mxu0 0
    %819 = vmatpush1.bf16.msra.mxu0 %v609
    %820 = vmatprep.subr.bf16.mxu0 0
    %821 = vmatpush1.bf16.msra.mxu0 %v610
    %822 = vmatprep.subr.bf16.mxu0 0
    %823 = vmatpush1.bf16.msra.mxu0 %v611
    %824 = vmatprep.subr.bf16.mxu0 0
    %825 = vmatpush1.bf16.msra.mxu0 %v612
    %826 = vmatprep.subr.bf16.mxu0 0
    %827 = vmatpush1.bf16.msra.mxu0 %v613
    %828 = vmatprep.subr.bf16.mxu0 0
    %829 = vmatpush1.bf16.msra.mxu0 %v614
    %830 = vmatprep.subr.bf16.mxu0 0
    %831 = vmatpush1.bf16.msra.mxu0 %v615
    %832 = vmatprep.mubr.bf16.mxu0 %v160
    %833 = vmatmul.mubr.bf16.gmra.mrb[0].mxu0 %v159
    %v834 = vpop.f32.mrb[0].mxu0
    %v835 = vadd.f32 %v795, %v834
    %v836 = vpop.f32.mrb[0].mxu0
    %v837 = vpop.f32.mrb[0].mxu0
    %v838 = vpop.f32.mrb[0].mxu0
    %839 = vdwg.mxu0
    %v840 = vmax.f32 %v835, 0.0
    %v841 = vpack.c.bf16 %v840, %v840
    %v842 = vld [vmem:[%s3] sm:$0xf]
    %v843 = vld [vmem:[%s3 + $0x4] sm:$0xf]
    %v844 = vld [vmem:[%s3 + $0x8] sm:$0xf]
    %v845 = vld [vmem:[%s3 + $0xc] sm:$0xf]
    %v846 = vld [vmem:[%s3 + $0x10] sm:$0xf]
    %v847 = vld [vmem:[%s3 + $0x14] sm:$0xf]
    %v848 = vld [vmem:[%s3 + $0x18] sm:$0xf]
    %v849 = vld [vmem:[%s3 + $0x1c] sm:$0xf]
    %v850 = vld [vmem:[%s3 + $0x20] sm:$0xf]
    %v851 = vld [vmem:[%s3 + $0x24] sm:$0xf]
    %v852 = vld [vmem:[%s3 + $0x28] sm:$0xf]
    %v853 = vld [vmem:[%s3 + $0x2c] sm:$0xf]
    %v854 = vld [vmem:[%s3 + $0x30] sm:$0xf]
    %v855 = vld [vmem:[%s3 + $0x34] sm:$0xf]
    %v856 = vld [vmem:[%s3 + $0x38] sm:$0xf]
    %v857 = vld [vmem:[%s3 + $0x3c] sm:$0xf]
    %v858 = vld [vmem:[%s4] sm:$0x1]
    %v860 = vlaneseq
    %v861 = vshrl.u32 %v860, 7
    %v862 = vsub.s32 0, %v861
    %v863 = vrot.slane %v858, %v862
    %v881 = vunpack.c.l.b16 %v842
    %v882 = vunpack.c.l.b16 %v843
    %v883 = vunpack.c.l.b16 %v844
    %v884 = vunpack.c.l.b16 %v845
    %v885 = vunpack.c.l.b16 %v846
    %v886 = vunpack.c.l.b16 %v847
    %v887 = vunpack.c.l.b16 %v848
    %v888 = vunpack.c.l.b16 %v849
    %v889 = vunpack.c.l.b16 %v850
    %v890 = vunpack.c.l.b16 %v851
    %v891 = vunpack.c.l.b16 %v852
    %v892 = vunpack.c.l.b16 %v853
    %v893 = vunpack.c.l.b16 %v854
    %v894 = vunpack.c.l.b16 %v855
    %v895 = vunpack.c.l.b16 %v856
    %v896 = vunpack.c.l.b16 %v857
    %v897 = vpack.c.b16 %v882, %v881
    %v898 = vpack.c.b16 %v884, %v883
    %v899 = vpack.c.b16 %v886, %v885
    %v900 = vpack.c.b16 %v888, %v887
    %v901 = vpack.c.b16 %v890, %v889
    %v902 = vpack.c.b16 %v892, %v891
    %v903 = vpack.c.b16 %v894, %v893
    %v904 = vpack.c.b16 %v896, %v895
    %913 = vmatprep.subr.bf16.mxu0 0
    %914 = vmatpush1.bf16.msra.mxu0 %v897
    %915 = vmatprep.subr.bf16.mxu0 0
    %916 = vmatpush1.bf16.msra.mxu0 %v898
    %917 = vmatprep.subr.bf16.mxu0 0
    %918 = vmatpush1.bf16.msra.mxu0 %v899
    %919 = vmatprep.subr.bf16.mxu0 0
    %920 = vmatpush1.bf16.msra.mxu0 %v900
    %921 = vmatprep.subr.bf16.mxu0 0
    %922 = vmatpush1.bf16.msra.mxu0 %v901
    %923 = vmatprep.subr.bf16.mxu0 0
    %924 = vmatpush1.bf16.msra.mxu0 %v902
    %925 = vmatprep.subr.bf16.mxu0 0
    %926 = vmatpush1.bf16.msra.mxu0 %v903
    %927 = vmatprep.subr.bf16.mxu0 0
    %928 = vmatpush1.bf16.msra.mxu0 %v904
    %929 = vmatprep.subr.bf16.mxu0 0
    %930 = vmatpush1.bf16.msra.mxu0 0
    %931 = vmatprep.subr.bf16.mxu0 0
    %932 = vmatpush1.bf16.msra.mxu0 0
    %933 = vmatprep.subr.bf16.mxu0 0
    %934 = vmatpush1.bf16.msra.mxu0 0
    %935 = vmatprep.subr.bf16.mxu0 0
    %936 = vmatpush1.bf16.msra.mxu0 0
    %937 = vmatprep.subr.bf16.mxu0 0
    %938 = vmatpush1.bf16.msra.mxu0 0
    %939 = vmatprep.subr.bf16.mxu0 0
    %940 = vmatpush1.bf16.msra.mxu0 0
    %941 = vmatprep.subr.bf16.mxu0 0
    %942 = vmatpush1.bf16.msra.mxu0 0
    %943 = vmatprep.subr.bf16.mxu0 0
    %944 = vmatpush1.bf16.msra.mxu0 0
    %945 = vmatprep.mubr.bf16.mxu0 0
    %946 = vmatmul.mubr.bf16.gmra.mrb[0].mxu0 %v841
    %v947 = vpop.f32.mrb[0].mxu0
    %v948 = vadd.f32 %v863, %v947
    %v949 = vpop.f32.mrb[0].mxu0
    %v950 = vpop.f32.mrb[0].mxu0
    %v951 = vpop.f32.mrb[0].mxu0
    %952 = vdwg.mxu0
    %v953 = vmax.f32 %v948, 0.0
    %v954 = vpack.c.bf16 %v953, %v953
    %v955 = vld [vmem:[%s5] sm:$0xf]
    %v956 = vld [vmem:[%s5 + $0x4] sm:$0xf]
    %v957 = vld [vmem:[%s5 + $0x8] sm:$0xf]
    %v958 = vld [vmem:[%s5 + $0xc] sm:$0xf]
    %v959 = vld [vmem:[%s5 + $0x10] sm:$0xf]
    %v960 = vld [vmem:[%s5 + $0x14] sm:$0xf]
    %v961 = vld [vmem:[%s5 + $0x18] sm:$0xf]
    %v962 = vld [vmem:[%s5 + $0x1c] sm:$0xf]
    %v963 = vld [vmem:[%s5 + $0x20] sm:$0xf]
    %v964 = vld [vmem:[%s5 + $0x24] sm:$0xf]
    %v965 = vld [vmem:[%s5 + $0x28] sm:$0xf]
    %v966 = vld [vmem:[%s5 + $0x2c] sm:$0xf]
    %v967 = vld [vmem:[%s5 + $0x30] sm:$0xf]
    %v968 = vld [vmem:[%s5 + $0x34] sm:$0xf]
    %v969 = vld [vmem:[%s5 + $0x38] sm:$0xf]
    %v970 = vld [vmem:[%s5 + $0x3c] sm:$0xf]
    %v987 = vunpack.c.l.b16 %v955
    %v988 = vunpack.c.l.b16 %v956
    %v989 = vunpack.c.l.b16 %v957
    %v990 = vunpack.c.l.b16 %v958
    %v991 = vunpack.c.l.b16 %v959
    %v992 = vunpack.c.l.b16 %v960
    %v993 = vunpack.c.l.b16 %v961
    %v994 = vunpack.c.l.b16 %v962
    %v995 = vunpack.c.l.b16 %v963
    %v996 = vunpack.c.l.b16 %v964
    %v997 = vunpack.c.l.b16 %v965
    %v998 = vunpack.c.l.b16 %v966
    %v999 = vunpack.c.l.b16 %v967
    %v1000 = vunpack.c.l.b16 %v968
    %v1001 = vunpack.c.l.b16 %v969
    %v1002 = vunpack.c.l.b16 %v970
    %v1003 = vpack.c.b16 %v988, %v987
    %v1004 = vpack.c.b16 %v990, %v989
    %v1005 = vpack.c.b16 %v992, %v991
    %v1006 = vpack.c.b16 %v994, %v993
    %v1007 = vpack.c.b16 %v996, %v995
    %v1008 = vpack.c.b16 %v998, %v997
    %v1009 = vpack.c.b16 %v1000, %v999
    %v1010 = vpack.c.b16 %v1002, %v1001
    %1019 = vmatprep.subr.bf16.mxu0 0
    %1020 = vmatpush1.bf16.msra.mxu0 %v1003
    %1021 = vmatprep.subr.bf16.mxu0 0
    %1022 = vmatpush1.bf16.msra.mxu0 %v1004
    %1023 = vmatprep.subr.bf16.mxu0 0
    %1024 = vmatpush1.bf16.msra.mxu0 %v1005
    %1025 = vmatprep.subr.bf16.mxu0 0
    %1026 = vmatpush1.bf16.msra.mxu0 %v1006
    %1027 = vmatprep.subr.bf16.mxu0 0
    %1028 = vmatpush1.bf16.msra.mxu0 %v1007
    %1029 = vmatprep.subr.bf16.mxu0 0
    %1030 = vmatpush1.bf16.msra.mxu0 %v1008
    %1031 = vmatprep.subr.bf16.mxu0 0
    %1032 = vmatpush1.bf16.msra.mxu0 %v1009
    %1033 = vmatprep.subr.bf16.mxu0 0
    %1034 = vmatpush1.bf16.msra.mxu0 %v1010
    %1035 = vmatprep.subr.bf16.mxu0 0
    %1036 = vmatpush1.bf16.msra.mxu0 0
    %1037 = vmatprep.subr.bf16.mxu0 0
    %1038 = vmatpush1.bf16.msra.mxu0 0
    %1039 = vmatprep.subr.bf16.mxu0 0
    %1040 = vmatpush1.bf16.msra.mxu0 0
    %1041 = vmatprep.subr.bf16.mxu0 0
    %1042 = vmatpush1.bf16.msra.mxu0 0
    %1043 = vmatprep.subr.bf16.mxu0 0
    %1044 = vmatpush1.bf16.msra.mxu0 0
    %1045 = vmatprep.subr.bf16.mxu0 0
    %1046 = vmatpush1.bf16.msra.mxu0 0
    %1047 = vmatprep.subr.bf16.mxu0 0
    %1048 = vmatpush1.bf16.msra.mxu0 0
    %1049 = vmatprep.subr.bf16.mxu0 0
    %1050 = vmatpush1.bf16.msra.mxu0 0
    %1051 = vmatprep.mubr.bf16.mxu0 0
    %1052 = vmatmul.mubr.bf16.gmra.mrb[0].mxu0 %v954
    %v1053 = vpop.f32.mrb[0].mxu0
    %v1054 = vadd.f32 0.0, %v1053
    %v1055 = vpop.f32.mrb[0].mxu0
    %v1056 = vpop.f32.mrb[0].mxu0
    %v1057 = vpop.f32.mrb[0].mxu0
    %1058 = vdwg.mxu0
    %v1059 = vadd.f32 %v840, %v1054
    %v1060 = vld [vmem:[%s6] sm:$0x1]
    %v1062 = vlaneseq
    %v1063 = vshrl.u32 %v1062, 7
    %v1064 = vsub.s32 0, %v1063
    %v1065 = vrot.slane %v1060, %v1064
    %v1067 = vadd.f32 %v1059, %v1065
    %v1068 = vpack.c.bf16 %v1067, %v1067
    %s1069 = scalar_lea.vmem %s3, 64
    %v1070 = vld [vmem:[%s1069] sm:$0xf]
    %v1071 = vld [vmem:[%s1069 + $0x4] sm:$0xf]
    %v1072 = vld [vmem:[%s1069 + $0x8] sm:$0xf]
    %v1073 = vld [vmem:[%s1069 + $0xc] sm:$0xf]
    %v1074 = vld [vmem:[%s1069 + $0x10] sm:$0xf]
    %v1075 = vld [vmem:[%s1069 + $0x14] sm:$0xf]
    %v1076 = vld [vmem:[%s1069 + $0x18] sm:$0xf]
    %v1077 = vld [vmem:[%s1069 + $0x1c] sm:$0xf]
    %v1078 = vld [vmem:[%s1069 + $0x20] sm:$0xf]
    %v1079 = vld [vmem:[%s1069 + $0x24] sm:$0xf]
    %v1080 = vld [vmem:[%s1069 + $0x28] sm:$0xf]
    %v1081 = vld [vmem:[%s1069 + $0x2c] sm:$0xf]
    %v1082 = vld [vmem:[%s1069 + $0x30] sm:$0xf]
    %v1083 = vld [vmem:[%s1069 + $0x34] sm:$0xf]
    %v1084 = vld [vmem:[%s1069 + $0x38] sm:$0xf]
    %v1085 = vld [vmem:[%s1069 + $0x3c] sm:$0xf]
    %s1086 = scalar_lea.vmem %s4, 1
    %v1087 = vld [vmem:[%s1086] sm:$0x1]
    %v1089 = vlaneseq
    %v1090 = vshrl.u32 %v1089, 7
    %v1091 = vsub.s32 0, %v1090
    %v1092 = vrot.slane %v1087, %v1091
    %v1110 = vunpack.c.l.b16 %v1070
    %v1111 = vunpack.c.l.b16 %v1071
    %v1112 = vunpack.c.l.b16 %v1072
    %v1113 = vunpack.c.l.b16 %v1073
    %v1114 = vunpack.c.l.b16 %v1074
    %v1115 = vunpack.c.l.b16 %v1075
    %v1116 = vunpack.c.l.b16 %v1076
    %v1117 = vunpack.c.l.b16 %v1077
    %v1118 = vunpack.c.l.b16 %v1078
    %v1119 = vunpack.c.l.b16 %v1079
    %v1120 = vunpack.c.l.b16 %v1080
    %v1121 = vunpack.c.l.b16 %v1081
    %v1122 = vunpack.c.l.b16 %v1082
    %v1123 = vunpack.c.l.b16 %v1083
    %v1124 = vunpack.c.l.b16 %v1084
    %v1125 = vunpack.c.l.b16 %v1085
    %v1126 = vpack.c.b16 %v1111, %v1110
    %v1127 = vpack.c.b16 %v1113, %v1112
    %v1128 = vpack.c.b16 %v1115, %v1114
    %v1129 = vpack.c.b16 %v1117, %v1116
    %v1130 = vpack.c.b16 %v1119, %v1118
    %v1131 = vpack.c.b16 %v1121, %v1120
    %v1132 = vpack.c.b16 %v1123, %v1122
    %v1133 = vpack.c.b16 %v1125, %v1124
    %1142 = vmatprep.subr.bf16.mxu0 0
    %1143 = vmatpush1.bf16.msra.mxu0 %v1126
    %1144 = vmatprep.subr.bf16.mxu0 0
    %1145 = vmatpush1.bf16.msra.mxu0 %v1127
    %1146 = vmatprep.subr.bf16.mxu0 0
    %1147 = vmatpush1.bf16.msra.mxu0 %v1128
    %1148 = vmatprep.subr.bf16.mxu0 0
    %1149 = vmatpush1.bf16.msra.mxu0 %v1129
    %1150 = vmatprep.subr.bf16.mxu0 0
    %1151 = vmatpush1.bf16.msra.mxu0 %v1130
    %1152 = vmatprep.subr.bf16.mxu0 0
    %1153 = vmatpush1.bf16.msra.mxu0 %v1131
    %1154 = vmatprep.subr.bf16.mxu0 0
    %1155 = vmatpush1.bf16.msra.mxu0 %v1132
    %1156 = vmatprep.subr.bf16.mxu0 0
    %1157 = vmatpush1.bf16.msra.mxu0 %v1133
    %1158 = vmatprep.subr.bf16.mxu0 0
    %1159 = vmatpush1.bf16.msra.mxu0 0
    %1160 = vmatprep.subr.bf16.mxu0 0
    %1161 = vmatpush1.bf16.msra.mxu0 0
    %1162 = vmatprep.subr.bf16.mxu0 0
    %1163 = vmatpush1.bf16.msra.mxu0 0
    %1164 = vmatprep.subr.bf16.mxu0 0
    %1165 = vmatpush1.bf16.msra.mxu0 0
    %1166 = vmatprep.subr.bf16.mxu0 0
    %1167 = vmatpush1.bf16.msra.mxu0 0
    %1168 = vmatprep.subr.bf16.mxu0 0
    %1169 = vmatpush1.bf16.msra.mxu0 0
    %1170 = vmatprep.subr.bf16.mxu0 0
    %1171 = vmatpush1.bf16.msra.mxu0 0
    %1172 = vmatprep.subr.bf16.mxu0 0
    %1173 = vmatpush1.bf16.msra.mxu0 0
    %1174 = vmatprep.mubr.bf16.mxu0 0
    %1175 = vmatmul.mubr.bf16.gmra.mrb[0].mxu0 %v1068
    %v1176 = vpop.f32.mrb[0].mxu0
    %v1177 = vadd.f32 %v1092, %v1176
    %v1178 = vpop.f32.mrb[0].mxu0
    %v1179 = vpop.f32.mrb[0].mxu0
    %v1180 = vpop.f32.mrb[0].mxu0
    %1181 = vdwg.mxu0
    %v1182 = vmax.f32 %v1177, 0.0
    %v1183 = vpack.c.bf16 %v1182, %v1182
    %s1184 = scalar_lea.vmem %s5, 64
    %v1185 = vld [vmem:[%s1184] sm:$0xf]
    %v1186 = vld [vmem:[%s1184 + $0x4] sm:$0xf]
    %v1187 = vld [vmem:[%s1184 + $0x8] sm:$0xf]
    %v1188 = vld [vmem:[%s1184 + $0xc] sm:$0xf]
    %v1189 = vld [vmem:[%s1184 + $0x10] sm:$0xf]
    %v1190 = vld [vmem:[%s1184 + $0x14] sm:$0xf]
    %v1191 = vld [vmem:[%s1184 + $0x18] sm:$0xf]
    %v1192 = vld [vmem:[%s1184 + $0x1c] sm:$0xf]
    %v1193 = vld [vmem:[%s1184 + $0x20] sm:$0xf]
    %v1194 = vld [vmem:[%s1184 + $0x24] sm:$0xf]
    %v1195 = vld [vmem:[%s1184 + $0x28] sm:$0xf]
    %v1196 = vld [vmem:[%s1184 + $0x2c] sm:$0xf]
    %v1197 = vld [vmem:[%s1184 + $0x30] sm:$0xf]
    %v1198 = vld [vmem:[%s1184 + $0x34] sm:$0xf]
    %v1199 = vld [vmem:[%s1184 + $0x38] sm:$0xf]
    %v1200 = vld [vmem:[%s1184 + $0x3c] sm:$0xf]
    %v1217 = vunpack.c.l.b16 %v1185
    %v1218 = vunpack.c.l.b16 %v1186
    %v1219 = vunpack.c.l.b16 %v1187
    %v1220 = vunpack.c.l.b16 %v1188
    %v1221 = vunpack.c.l.b16 %v1189
    %v1222 = vunpack.c.l.b16 %v1190
    %v1223 = vunpack.c.l.b16 %v1191
    %v1224 = vunpack.c.l.b16 %v1192
    %v1225 = vunpack.c.l.b16 %v1193
    %v1226 = vunpack.c.l.b16 %v1194
    %v1227 = vunpack.c.l.b16 %v1195
    %v1228 = vunpack.c.l.b16 %v1196
    %v1229 = vunpack.c.l.b16 %v1197
    %v1230 = vunpack.c.l.b16 %v1198
    %v1231 = vunpack.c.l.b16 %v1199
    %v1232 = vunpack.c.l.b16 %v1200
    %v1233 = vpack.c.b16 %v1218, %v1217
    %v1234 = vpack.c.b16 %v1220, %v1219
    %v1235 = vpack.c.b16 %v1222, %v1221
    %v1236 = vpack.c.b16 %v1224, %v1223
    %v1237 = vpack.c.b16 %v1226, %v1225
    %v1238 = vpack.c.b16 %v1228, %v1227
    %v1239 = vpack.c.b16 %v1230, %v1229
    %v1240 = vpack.c.b16 %v1232, %v1231
    %1249 = vmatprep.subr.bf16.mxu0 0
    %1250 = vmatpush1.bf16.msra.mxu0 %v1233
    %1251 = vmatprep.subr.bf16.mxu0 0
    %1252 = vmatpush1.bf16.msra.mxu0 %v1234
    %1253 = vmatprep.subr.bf16.mxu0 0
    %1254 = vmatpush1.bf16.msra.mxu0 %v1235
    %1255 = vmatprep.subr.bf16.mxu0 0
    %1256 = vmatpush1.bf16.msra.mxu0 %v1236
    %1257 = vmatprep.subr.bf16.mxu0 0
    %1258 = vmatpush1.bf16.msra.mxu0 %v1237
    %1259 = vmatprep.subr.bf16.mxu0 0
    %1260 = vmatpush1.bf16.msra.mxu0 %v1238
    %1261 = vmatprep.subr.bf16.mxu0 0
    %1262 = vmatpush1.bf16.msra.mxu0 %v1239
    %1263 = vmatprep.subr.bf16.mxu0 0
    %1264 = vmatpush1.bf16.msra.mxu0 %v1240
    %1265 = vmatprep.subr.bf16.mxu0 0
    %1266 = vmatpush1.bf16.msra.mxu0 0
    %1267 = vmatprep.subr.bf16.mxu0 0
    %1268 = vmatpush1.bf16.msra.mxu0 0
    %1269 = vmatprep.subr.bf16.mxu0 0
    %1270 = vmatpush1.bf16.msra.mxu0 0
    %1271 = vmatprep.subr.bf16.mxu0 0
    %1272 = vmatpush1.bf16.msra.mxu0 0
    %1273 = vmatprep.subr.bf16.mxu0 0
    %1274 = vmatpush1.bf16.msra.mxu0 0
    %1275 = vmatprep.subr.bf16.mxu0 0
    %1276 = vmatpush1.bf16.msra.mxu0 0
    %1277 = vmatprep.subr.bf16.mxu0 0
    %1278 = vmatpush1.bf16.msra.mxu0 0
    %1279 = vmatprep.subr.bf16.mxu0 0
    %1280 = vmatpush1.bf16.msra.mxu0 0
    %1281 = vmatprep.mubr.bf16.mxu0 0
    %1282 = vmatmul.mubr.bf16.gmra.mrb[0].mxu0 %v1183
    %v1283 = vpop.f32.mrb[0].mxu0
    %v1284 = vadd.f32 0.0, %v1283
    %v1285 = vpop.f32.mrb[0].mxu0
    %v1286 = vpop.f32.mrb[0].mxu0
    %v1287 = vpop.f32.mrb[0].mxu0
    %1288 = vdwg.mxu0
    %v1289 = vadd.f32 %v1067, %v1284
    %s1290 = scalar_lea.vmem %s6, 1
    %v1291 = vld [vmem:[%s1290] sm:$0x1]
    %v1293 = vlaneseq
    %v1294 = vshrl.u32 %v1293, 7
    %v1295 = vsub.s32 0, %v1294
    %v1296 = vrot.slane %v1291, %v1295
    %v1298 = vadd.f32 %v1289, %v1296
    %v1299 = vpack.c.bf16 %v1298, %v1298
    %v1300 = vld [vmem:[%s7] sm:$0xf]
    %v1301 = vld [vmem:[%s7 + $0x4] sm:$0xf]
    %v1302 = vld [vmem:[%s7 + $0x8] sm:$0xf]
    %v1303 = vld [vmem:[%s7 + $0xc] sm:$0xf]
    %v1304 = vld [vmem:[%s7 + $0x10] sm:$0xf]
    %v1305 = vld [vmem:[%s7 + $0x14] sm:$0xf]
    %v1306 = vld [vmem:[%s7 + $0x18] sm:$0xf]
    %v1307 = vld [vmem:[%s7 + $0x1c] sm:$0xf]
    %v1308 = vld [vmem:[%s7 + $0x20] sm:$0xf]
    %v1309 = vld [vmem:[%s7 + $0x24] sm:$0xf]
    %v1310 = vld [vmem:[%s7 + $0x28] sm:$0xf]
    %v1311 = vld [vmem:[%s7 + $0x2c] sm:$0xf]
    %v1312 = vld [vmem:[%s7 + $0x30] sm:$0xf]
    %v1313 = vld [vmem:[%s7 + $0x34] sm:$0xf]
    %v1314 = vld [vmem:[%s7 + $0x38] sm:$0xf]
    %v1315 = vld [vmem:[%s7 + $0x3c] sm:$0xf]
    %v1316 = vld [vmem:[#allocation5] sm:$0x1]
    %v1318 = vlaneseq
    %v1319 = vshrl.u32 %v1318, 7
    %v1320 = vsub.s32 0, %v1319
    %v1321 = vrot.slane %v1316, %v1320
    %v1339 = vunpack.c.l.b16 %v1300
    %v1340 = vunpack.c.l.b16 %v1301
    %v1341 = vunpack.c.l.b16 %v1302
    %v1342 = vunpack.c.l.b16 %v1303
    %v1343 = vunpack.c.l.b16 %v1304
    %v1344 = vunpack.c.l.b16 %v1305
    %v1345 = vunpack.c.l.b16 %v1306
    %v1346 = vunpack.c.l.b16 %v1307
    %v1347 = vunpack.c.l.b16 %v1308
    %v1348 = vunpack.c.l.b16 %v1309
    %v1349 = vunpack.c.l.b16 %v1310
    %v1350 = vunpack.c.l.b16 %v1311
    %v1351 = vunpack.c.l.b16 %v1312
    %v1352 = vunpack.c.l.b16 %v1313
    %v1353 = vunpack.c.l.b16 %v1314
    %v1354 = vunpack.c.l.b16 %v1315
    %v1355 = vpack.c.b16 %v1340, %v1339
    %v1356 = vpack.c.b16 %v1342, %v1341
    %v1357 = vpack.c.b16 %v1344, %v1343
    %v1358 = vpack.c.b16 %v1346, %v1345
    %v1359 = vpack.c.b16 %v1348, %v1347
    %v1360 = vpack.c.b16 %v1350, %v1349
    %v1361 = vpack.c.b16 %v1352, %v1351
    %v1362 = vpack.c.b16 %v1354, %v1353
    %1371 = vmatprep.subr.bf16.mxu0 0
    %1372 = vmatpush1.bf16.msra.mxu0 %v1355
    %1373 = vmatprep.subr.bf16.mxu0 0
    %1374 = vmatpush1.bf16.msra.mxu0 %v1356
    %1375 = vmatprep.subr.bf16.mxu0 0
    %1376 = vmatpush1.bf16.msra.mxu0 %v1357
    %1377 = vmatprep.subr.bf16.mxu0 0
    %1378 = vmatpush1.bf16.msra.mxu0 %v1358
    %1379 = vmatprep.subr.bf16.mxu0 0
    %1380 = vmatpush1.bf16.msra.mxu0 %v1359
    %1381 = vmatprep.subr.bf16.mxu0 0
    %1382 = vmatpush1.bf16.msra.mxu0 %v1360
    %1383 = vmatprep.subr.bf16.mxu0 0
    %1384 = vmatpush1.bf16.msra.mxu0 %v1361
    %1385 = vmatprep.subr.bf16.mxu0 0
    %1386 = vmatpush1.bf16.msra.mxu0 %v1362
    %1387 = vmatprep.subr.bf16.mxu0 0
    %1388 = vmatpush1.bf16.msra.mxu0 0
    %1389 = vmatprep.subr.bf16.mxu0 0
    %1390 = vmatpush1.bf16.msra.mxu0 0
    %1391 = vmatprep.subr.bf16.mxu0 0
    %1392 = vmatpush1.bf16.msra.mxu0 0
    %1393 = vmatprep.subr.bf16.mxu0 0
    %1394 = vmatpush1.bf16.msra.mxu0 0
    %1395 = vmatprep.subr.bf16.mxu0 0
    %1396 = vmatpush1.bf16.msra.mxu0 0
    %1397 = vmatprep.subr.bf16.mxu0 0
    %1398 = vmatpush1.bf16.msra.mxu0 0
    %1399 = vmatprep.subr.bf16.mxu0 0
    %1400 = vmatpush1.bf16.msra.mxu0 0
    %1401 = vmatprep.subr.bf16.mxu0 0
    %1402 = vmatpush1.bf16.msra.mxu0 0
    %1403 = vmatprep.mubr.bf16.mxu0 0
    %1404 = vmatmul.mubr.bf16.gmra.mrb[0].mxu0 %v1299
    %v1405 = vpop.f32.mrb[0].mxu0
    %v1406 = vadd.f32 %v1321, %v1405
    %v1407 = vpop.f32.mrb[0].mxu0
    %v1408 = vpop.f32.mrb[0].mxu0
    %v1409 = vpop.f32.mrb[0].mxu0
    %1410 = vdwg.mxu0
    %v1411 = vld [vmem:[%s9] sm:$0xf]
    %v1412 = vld [vmem:[%s9 + $0x4] sm:$0xf]
    %v1413 = vld [vmem:[%s9 + $0x8] sm:$0xf]
    %v1414 = vld [vmem:[%s9 + $0xc] sm:$0xf]
    %v1415 = vld [vmem:[%s9 + $0x10] sm:$0xf]
    %v1416 = vld [vmem:[%s9 + $0x14] sm:$0xf]
    %v1417 = vld [vmem:[%s9 + $0x18] sm:$0xf]
    %v1418 = vld [vmem:[%s9 + $0x1c] sm:$0xf]
    %v1419 = vld [vmem:[%s9 + $0x20] sm:$0xf]
    %v1420 = vld [vmem:[%s9 + $0x24] sm:$0xf]
    %v1421 = vld [vmem:[%s9 + $0x28] sm:$0xf]
    %v1422 = vld [vmem:[%s9 + $0x2c] sm:$0xf]
    %v1423 = vld [vmem:[%s9 + $0x30] sm:$0xf]
    %v1424 = vld [vmem:[%s9 + $0x34] sm:$0xf]
    %v1425 = vld [vmem:[%s9 + $0x38] sm:$0xf]
    %v1426 = vld [vmem:[%s9 + $0x3c] sm:$0xf]
    %v1427 = vld [vmem:[#allocation7] sm:$0x1]
    %v1429 = vlaneseq
    %v1430 = vshrl.u32 %v1429, 7
    %v1431 = vsub.s32 0, %v1430
    %v1432 = vrot.slane %v1427, %v1431
    %v1450 = vunpack.c.l.b16 %v1411
    %v1451 = vunpack.c.l.b16 %v1412
    %v1452 = vunpack.c.l.b16 %v1413
    %v1453 = vunpack.c.l.b16 %v1414
    %v1454 = vunpack.c.l.b16 %v1415
    %v1455 = vunpack.c.l.b16 %v1416
    %v1456 = vunpack.c.l.b16 %v1417
    %v1457 = vunpack.c.l.b16 %v1418
    %v1458 = vunpack.c.l.b16 %v1419
    %v1459 = vunpack.c.l.b16 %v1420
    %v1460 = vunpack.c.l.b16 %v1421
    %v1461 = vunpack.c.l.b16 %v1422
    %v1462 = vunpack.c.l.b16 %v1423
    %v1463 = vunpack.c.l.b16 %v1424
    %v1464 = vunpack.c.l.b16 %v1425
    %v1465 = vunpack.c.l.b16 %v1426
    %v1466 = vpack.c.b16 %v1451, %v1450
    %v1467 = vpack.c.b16 %v1453, %v1452
    %v1468 = vpack.c.b16 %v1455, %v1454
    %v1469 = vpack.c.b16 %v1457, %v1456
    %v1470 = vpack.c.b16 %v1459, %v1458
    %v1471 = vpack.c.b16 %v1461, %v1460
    %v1472 = vpack.c.b16 %v1463, %v1462
    %v1473 = vpack.c.b16 %v1465, %v1464
    %1482 = vmatprep.subr.bf16.mxu0 0
    %1483 = vmatpush1.bf16.msra.mxu0 %v1466
    %1484 = vmatprep.subr.bf16.mxu0 0
    %1485 = vmatpush1.bf16.msra.mxu0 %v1467
    %1486 = vmatprep.subr.bf16.mxu0 0
    %1487 = vmatpush1.bf16.msra.mxu0 %v1468
    %1488 = vmatprep.subr.bf16.mxu0 0
    %1489 = vmatpush1.bf16.msra.mxu0 %v1469
    %1490 = vmatprep.subr.bf16.mxu0 0
    %1491 = vmatpush1.bf16.msra.mxu0 %v1470
    %1492 = vmatprep.subr.bf16.mxu0 0
    %1493 = vmatpush1.bf16.msra.mxu0 %v1471
    %1494 = vmatprep.subr.bf16.mxu0 0
    %1495 = vmatpush1.bf16.msra.mxu0 %v1472
    %1496 = vmatprep.subr.bf16.mxu0 0
    %1497 = vmatpush1.bf16.msra.mxu0 %v1473
    %1498 = vmatprep.subr.bf16.mxu0 0
    %1499 = vmatpush1.bf16.msra.mxu0 0
    %1500 = vmatprep.subr.bf16.mxu0 0
    %1501 = vmatpush1.bf16.msra.mxu0 0
    %1502 = vmatprep.subr.bf16.mxu0 0
    %1503 = vmatpush1.bf16.msra.mxu0 0
    %1504 = vmatprep.subr.bf16.mxu0 0
    %1505 = vmatpush1.bf16.msra.mxu0 0
    %1506 = vmatprep.subr.bf16.mxu0 0
    %1507 = vmatpush1.bf16.msra.mxu0 0
    %1508 = vmatprep.subr.bf16.mxu0 0
    %1509 = vmatpush1.bf16.msra.mxu0 0
    %1510 = vmatprep.subr.bf16.mxu0 0
    %1511 = vmatpush1.bf16.msra.mxu0 0
    %1512 = vmatprep.subr.bf16.mxu0 0
    %1513 = vmatpush1.bf16.msra.mxu0 0
    %1514 = vmatprep.mubr.bf16.mxu0 0
    %1515 = vmatmul.mubr.bf16.gmra.mrb[0].mxu0 %v1299
    %v1516 = vpop.f32.mrb[0].mxu0
    %v1517 = vadd.f32 %v1432, %v1516
    %v1518 = vpop.f32.mrb[0].mxu0
    %v1519 = vpop.f32.mrb[0].mxu0
    %v1520 = vpop.f32.mrb[0].mxu0
    %1521 = vdwg.mxu0
    %v1522 = vmul.f32 %v1517, 0.5
    %v1523 = vmul.f32 %v1522, 1.442695
    %v1524 = vpow.pop %v1523
    %v1525 = vmul.f32 %v1524, %v1524
    %v1526 = vld [vmem:[%s13] sm:$0xff]
    %s1527 = scalar_lea.vmem %s13, 8
    %v1528 = vld [vmem:[%s1527] sm:$0xff]
    %s1529 = scalar_lea.vmem %s13, 16
    %v1530 = vld [vmem:[%s1529] sm:$0xff]
    %v1531 = vpack.c.bf16 %v1406, %v1406
    %v1532 = vld [vmem:[%s11] sm:$0xf]
    %v1533 = vld [vmem:[%s11 + $0x4] sm:$0xf]
    %v1534 = vld [vmem:[%s11 + $0x8] sm:$0xf]
    %v1535 = vld [vmem:[%s11 + $0xc] sm:$0xf]
    %v1536 = vld [vmem:[%s11 + $0x10] sm:$0xf]
    %v1537 = vld [vmem:[%s11 + $0x14] sm:$0xf]
    %v1538 = vld [vmem:[%s11 + $0x18] sm:$0xf]
    %v1539 = vld [vmem:[%s11 + $0x1c] sm:$0xf]
    %v1540 = vld [vmem:[%s11 + $0x20] sm:$0xf]
    %v1541 = vld [vmem:[%s11 + $0x24] sm:$0xf]
    %v1542 = vld [vmem:[%s11 + $0x28] sm:$0xf]
    %v1543 = vld [vmem:[%s11 + $0x2c] sm:$0xf]
    %v1544 = vld [vmem:[%s11 + $0x30] sm:$0xf]
    %v1545 = vld [vmem:[%s11 + $0x34] sm:$0xf]
    %v1546 = vld [vmem:[%s11 + $0x38] sm:$0xf]
    %v1547 = vld [vmem:[%s11 + $0x3c] sm:$0xf]
    %v1564 = vunpack.c.l.b16 %v1532
    %v1565 = vunpack.c.l.b16 %v1533
    %v1566 = vunpack.c.l.b16 %v1534
    %v1567 = vunpack.c.l.b16 %v1535
    %v1568 = vunpack.c.l.b16 %v1536
    %v1569 = vunpack.c.l.b16 %v1537
    %v1570 = vunpack.c.l.b16 %v1538
    %v1571 = vunpack.c.l.b16 %v1539
    %v1572 = vunpack.c.l.b16 %v1540
    %v1573 = vunpack.c.l.b16 %v1541
    %v1574 = vunpack.c.l.b16 %v1542
    %v1575 = vunpack.c.l.b16 %v1543
    %v1576 = vunpack.c.l.b16 %v1544
    %v1577 = vunpack.c.l.b16 %v1545
    %v1578 = vunpack.c.l.b16 %v1546
    %v1579 = vunpack.c.l.b16 %v1547
    %v1580 = vpack.c.b16 %v1565, %v1564
    %v1581 = vpack.c.b16 %v1567, %v1566
    %v1582 = vpack.c.b16 %v1569, %v1568
    %v1583 = vpack.c.b16 %v1571, %v1570
    %v1584 = vpack.c.b16 %v1573, %v1572
    %v1585 = vpack.c.b16 %v1575, %v1574
    %v1586 = vpack.c.b16 %v1577, %v1576
    %v1587 = vpack.c.b16 %v1579, %v1578
    %1596 = vmatprep.subr.bf16.mxu0 0
    %1597 = vmatpush1.bf16.msra.mxu0 %v1580
    %1598 = vmatprep.subr.bf16.mxu0 0
    %1599 = vmatpush1.bf16.msra.mxu0 %v1581
    %1600 = vmatprep.subr.bf16.mxu0 0
    %1601 = vmatpush1.bf16.msra.mxu0 %v1582
    %1602 = vmatprep.subr.bf16.mxu0 0
    %1603 = vmatpush1.bf16.msra.mxu0 %v1583
    %1604 = vmatprep.subr.bf16.mxu0 0
    %1605 = vmatpush1.bf16.msra.mxu0 %v1584
    %1606 = vmatprep.subr.bf16.mxu0 0
    %1607 = vmatpush1.bf16.msra.mxu0 %v1585
    %1608 = vmatprep.subr.bf16.mxu0 0
    %1609 = vmatpush1.bf16.msra.mxu0 %v1586
    %1610 = vmatprep.subr.bf16.mxu0 0
    %1611 = vmatpush1.bf16.msra.mxu0 %v1587
    %1612 = vmatprep.subr.bf16.mxu0 0
    %1613 = vmatpush1.bf16.msra.mxu0 0
    %1614 = vmatprep.subr.bf16.mxu0 0
    %1615 = vmatpush1.bf16.msra.mxu0 0
    %1616 = vmatprep.subr.bf16.mxu0 0
    %1617 = vmatpush1.bf16.msra.mxu0 0
    %1618 = vmatprep.subr.bf16.mxu0 0
    %1619 = vmatpush1.bf16.msra.mxu0 0
    %1620 = vmatprep.subr.bf16.mxu0 0
    %1621 = vmatpush1.bf16.msra.mxu0 0
    %1622 = vmatprep.subr.bf16.mxu0 0
    %1623 = vmatpush1.bf16.msra.mxu0 0
    %1624 = vmatprep.subr.bf16.mxu0 0
    %1625 = vmatpush1.bf16.msra.mxu0 0
    %1626 = vmatprep.subr.bf16.mxu0 0
    %1627 = vmatpush1.bf16.msra.mxu0 0
    %1628 = vmatprep.mubr.bf16.mxu0 0
    %1629 = vmatmul.mubr.bf16.gmra.mrb[0].mxu0 %v1531
    %v1630 = vpop.f32.mrb[0].mxu0
    %v1631 = vadd.f32 0.0, %v1630
    %v1632 = vpop.f32.mrb[0].mxu0
    %v1633 = vpop.f32.mrb[0].mxu0
    %v1634 = vpop.f32.mrb[0].mxu0
    %1635 = vdwg.mxu0
    %1637 = vset.pattern.permute.xlu0 0
    %1638 = vperm.xlu0 %1637, %v1528
    %v1639 = vpop.permute.xlu0 %1638
    %v1641 = vmul.f32 %v1639, %v1631
    %v1642 = vrot.slane %v1631, 7
    %1644 = vset.pattern.permute.xlu0 0
    %1645 = vperm.xlu0 %1644, %v1526
    %v1646 = vpop.permute.xlu0 %1645
    %v1648 = vmul.f32 %v1646, %v1642
    %v1649 = vadd.f32 %v1641, %v1648
    %v1650 = vrot.slane %v1631, 1
    %1652 = vset.pattern.permute.xlu0 0
    %1653 = vperm.xlu0 %1652, %v1530
    %v1654 = vpop.permute.xlu0 %1653
    %v1656 = vmul.f32 %v1654, %v1650
    %v1657 = vadd.f32 %v1649, %v1656
    %v1658 = vld [vmem:[#allocation8] sm:$0x1]
    %v1660 = vlaneseq
    %v1661 = vshrl.u32 %v1660, 7
    %v1662 = vsub.s32 0, %v1661
    %v1663 = vrot.slane %v1658, %v1662
    %v1665 = vadd.f32 %v1657, %v1663
    %v1666 = vmax.f32 %v1665, 0.0
    %v1667 = vpack.c.bf16 %v1666, %v1666
    %s1668 = scalar_lea.vmem %s11, 64
    %v1669 = vld [vmem:[%s1668] sm:$0xf]
    %v1670 = vld [vmem:[%s1668 + $0x4] sm:$0xf]
    %v1671 = vld [vmem:[%s1668 + $0x8] sm:$0xf]
    %v1672 = vld [vmem:[%s1668 + $0xc] sm:$0xf]
    %v1673 = vld [vmem:[%s1668 + $0x10] sm:$0xf]
    %v1674 = vld [vmem:[%s1668 + $0x14] sm:$0xf]
    %v1675 = vld [vmem:[%s1668 + $0x18] sm:$0xf]
    %v1676 = vld [vmem:[%s1668 + $0x1c] sm:$0xf]
    %v1677 = vld [vmem:[%s1668 + $0x20] sm:$0xf]
    %v1678 = vld [vmem:[%s1668 + $0x24] sm:$0xf]
    %v1679 = vld [vmem:[%s1668 + $0x28] sm:$0xf]
    %v1680 = vld [vmem:[%s1668 + $0x2c] sm:$0xf]
    %v1681 = vld [vmem:[%s1668 + $0x30] sm:$0xf]
    %v1682 = vld [vmem:[%s1668 + $0x34] sm:$0xf]
    %v1683 = vld [vmem:[%s1668 + $0x38] sm:$0xf]
    %v1684 = vld [vmem:[%s1668 + $0x3c] sm:$0xf]
    %v1701 = vunpack.c.l.b16 %v1669
    %v1702 = vunpack.c.l.b16 %v1670
    %v1703 = vunpack.c.l.b16 %v1671
    %v1704 = vunpack.c.l.b16 %v1672
    %v1705 = vunpack.c.l.b16 %v1673
    %v1706 = vunpack.c.l.b16 %v1674
    %v1707 = vunpack.c.l.b16 %v1675
    %v1708 = vunpack.c.l.b16 %v1676
    %v1709 = vunpack.c.l.b16 %v1677
    %v1710 = vunpack.c.l.b16 %v1678
    %v1711 = vunpack.c.l.b16 %v1679
    %v1712 = vunpack.c.l.b16 %v1680
    %v1713 = vunpack.c.l.b16 %v1681
    %v1714 = vunpack.c.l.b16 %v1682
    %v1715 = vunpack.c.l.b16 %v1683
    %v1716 = vunpack.c.l.b16 %v1684
    %v1717 = vpack.c.b16 %v1702, %v1701
    %v1718 = vpack.c.b16 %v1704, %v1703
    %v1719 = vpack.c.b16 %v1706, %v1705
    %v1720 = vpack.c.b16 %v1708, %v1707
    %v1721 = vpack.c.b16 %v1710, %v1709
    %v1722 = vpack.c.b16 %v1712, %v1711
    %v1723 = vpack.c.b16 %v1714, %v1713
    %v1724 = vpack.c.b16 %v1716, %v1715
    %1733 = vmatprep.subr.bf16.mxu0 0
    %1734 = vmatpush1.bf16.msra.mxu0 %v1717
    %1735 = vmatprep.subr.bf16.mxu0 0
    %1736 = vmatpush1.bf16.msra.mxu0 %v1718
    %1737 = vmatprep.subr.bf16.mxu0 0
    %1738 = vmatpush1.bf16.msra.mxu0 %v1719
    %1739 = vmatprep.subr.bf16.mxu0 0
    %1740 = vmatpush1.bf16.msra.mxu0 %v1720
    %1741 = vmatprep.subr.bf16.mxu0 0
    %1742 = vmatpush1.bf16.msra.mxu0 %v1721
    %1743 = vmatprep.subr.bf16.mxu0 0
    %1744 = vmatpush1.bf16.msra.mxu0 %v1722
    %1745 = vmatprep.subr.bf16.mxu0 0
    %1746 = vmatpush1.bf16.msra.mxu0 %v1723
    %1747 = vmatprep.subr.bf16.mxu0 0
    %1748 = vmatpush1.bf16.msra.mxu0 %v1724
    %1749 = vmatprep.subr.bf16.mxu0 0
    %1750 = vmatpush1.bf16.msra.mxu0 0
    %1751 = vmatprep.subr.bf16.mxu0 0
    %1752 = vmatpush1.bf16.msra.mxu0 0
    %1753 = vmatprep.subr.bf16.mxu0 0
    %1754 = vmatpush1.bf16.msra.mxu0 0
    %1755 = vmatprep.subr.bf16.mxu0 0
    %1756 = vmatpush1.bf16.msra.mxu0 0
    %1757 = vmatprep.subr.bf16.mxu0 0
    %1758 = vmatpush1.bf16.msra.mxu0 0
    %1759 = vmatprep.subr.bf16.mxu0 0
    %1760 = vmatpush1.bf16.msra.mxu0 0
    %1761 = vmatprep.subr.bf16.mxu0 0
    %1762 = vmatpush1.bf16.msra.mxu0 0
    %1763 = vmatprep.subr.bf16.mxu0 0
    %1764 = vmatpush1.bf16.msra.mxu0 0
    %1765 = vmatprep.mubr.bf16.mxu0 0
    %1766 = vmatmul.mubr.bf16.gmra.mrb[0].mxu0 %v1667
    %v1767 = vpop.f32.mrb[0].mxu0
    %v1768 = vadd.f32 0.0, %v1767
    %v1769 = vpop.f32.mrb[0].mxu0
    %v1770 = vpop.f32.mrb[0].mxu0
    %v1771 = vpop.f32.mrb[0].mxu0
    %1772 = vdwg.mxu0
    %v1773 = vmul.f32 %v1639, %v1768
    %v1774 = vrot.slane %v1768, 7
    %v1775 = vmul.f32 %v1646, %v1774
    %v1776 = vadd.f32 %v1773, %v1775
    %v1777 = vrot.slane %v1768, 1
    %v1778 = vmul.f32 %v1654, %v1777
    %v1779 = vadd.f32 %v1776, %v1778
    %s1780 = scalar_lea.vmem [#allocation8], 1
    %v1781 = vld [vmem:[%s1780] sm:$0x1]
    %v1783 = vlaneseq
    %v1784 = vshrl.u32 %v1783, 7
    %v1785 = vsub.s32 0, %v1784
    %v1786 = vrot.slane %v1781, %v1785
    %v1788 = vadd.f32 %v1779, %v1786
    %v1789 = vmax.f32 %v1788, 0.0
    %1790 = vst [vmem:[#allocation13] sm:$0xff] %v1789
    %v1791 = vld [vmem:[%s14] sm:$0x1]
    %v1793 = vlaneseq
    %v1794 = vshrl.u32 %v1793, 7
    %v1795 = vsub.s32 0, %v1794
    %v1796 = vrot.slane %v1791, %v1795
    %v1798 = vmul.f32 %v1789, %v1796
    %v1799 = vmul.f32 %v1524, %v1798
    %v1800 = vadd.f32 %v1406, %v1799
    %v1801 = vpack.c.bf16 %v1800, %v1800
    %v1802 = vld [vmem:[#allocation10] sm:$0xf]
    %v1803 = vld [vmem:[#allocation10 + $0x4] sm:$0xf]
    %v1804 = vld [vmem:[#allocation10 + $0x8] sm:$0xf]
    %v1805 = vld [vmem:[#allocation10 + $0xc] sm:$0xf]
    %v1806 = vld [vmem:[#allocation10 + $0x10] sm:$0xf]
    %v1807 = vld [vmem:[#allocation10 + $0x14] sm:$0xf]
    %v1808 = vld [vmem:[#allocation10 + $0x18] sm:$0xf]
    %v1809 = vld [vmem:[#allocation10 + $0x1c] sm:$0xf]
    %v1810 = vld [vmem:[#allocation10 + $0x20] sm:$0xf]
    %v1811 = vld [vmem:[#allocation10 + $0x24] sm:$0xf]
    %v1812 = vld [vmem:[#allocation10 + $0x28] sm:$0xf]
    %v1813 = vld [vmem:[#allocation10 + $0x2c] sm:$0xf]
    %v1814 = vld [vmem:[#allocation10 + $0x30] sm:$0xf]
    %v1815 = vld [vmem:[#allocation10 + $0x34] sm:$0xf]
    %v1816 = vld [vmem:[#allocation10 + $0x38] sm:$0xf]
    %v1817 = vld [vmem:[#allocation10 + $0x3c] sm:$0xf]
    %v1818 = vld [vmem:[#allocation11] sm:$0x1]
    %v1820 = vlaneseq
    %v1821 = vshrl.u32 %v1820, 7
    %v1822 = vsub.s32 0, %v1821
    %v1823 = vrot.slane %v1818, %v1822
    %v1841 = vunpack.c.l.b16 %v1802
    %v1842 = vunpack.c.l.b16 %v1803
    %v1843 = vunpack.c.l.b16 %v1804
    %v1844 = vunpack.c.l.b16 %v1805
    %v1845 = vunpack.c.l.b16 %v1806
    %v1846 = vunpack.c.l.b16 %v1807
    %v1847 = vunpack.c.l.b16 %v1808
    %v1848 = vunpack.c.l.b16 %v1809
    %v1849 = vunpack.c.l.b16 %v1810
    %v1850 = vunpack.c.l.b16 %v1811
    %v1851 = vunpack.c.l.b16 %v1812
    %v1852 = vunpack.c.l.b16 %v1813
    %v1853 = vunpack.c.l.b16 %v1814
    %v1854 = vunpack.c.l.b16 %v1815
    %v1855 = vunpack.c.l.b16 %v1816
    %v1856 = vunpack.c.l.b16 %v1817
    %v1857 = vpack.c.b16 %v1842, %v1841
    %v1858 = vpack.c.b16 %v1844, %v1843
    %v1859 = vpack.c.b16 %v1846, %v1845
    %v1860 = vpack.c.b16 %v1848, %v1847
    %v1861 = vpack.c.b16 %v1850, %v1849
    %v1862 = vpack.c.b16 %v1852, %v1851
    %v1863 = vpack.c.b16 %v1854, %v1853
    %v1864 = vpack.c.b16 %v1856, %v1855
    %1873 = vmatprep.subr.bf16.mxu0 0
    %1874 = vmatpush1.bf16.msra.mxu0 %v1857
    %1875 = vmatprep.subr.bf16.mxu0 0
    %1876 = vmatpush1.bf16.msra.mxu0 %v1858
    %1877 = vmatprep.subr.bf16.mxu0 0
    %1878 = vmatpush1.bf16.msra.mxu0 %v1859
    %1879 = vmatprep.subr.bf16.mxu0 0
    %1880 = vmatpush1.bf16.msra.mxu0 %v1860
    %1881 = vmatprep.subr.bf16.mxu0 0
    %1882 = vmatpush1.bf16.msra.mxu0 %v1861
    %1883 = vmatprep.subr.bf16.mxu0 0
    %1884 = vmatpush1.bf16.msra.mxu0 %v1862
    %1885 = vmatprep.subr.bf16.mxu0 0
    %1886 = vmatpush1.bf16.msra.mxu0 %v1863
    %1887 = vmatprep.subr.bf16.mxu0 0
    %1888 = vmatpush1.bf16.msra.mxu0 %v1864
    %1889 = vmatprep.subr.bf16.mxu0 0
    %1890 = vmatpush1.bf16.msra.mxu0 0
    %1891 = vmatprep.subr.bf16.mxu0 0
    %1892 = vmatpush1.bf16.msra.mxu0 0
    %1893 = vmatprep.subr.bf16.mxu0 0
    %1894 = vmatpush1.bf16.msra.mxu0 0
    %1895 = vmatprep.subr.bf16.mxu0 0
    %1896 = vmatpush1.bf16.msra.mxu0 0
    %1897 = vmatprep.subr.bf16.mxu0 0
    %1898 = vmatpush1.bf16.msra.mxu0 0
    %1899 = vmatprep.subr.bf16.mxu0 0
    %1900 = vmatpush1.bf16.msra.mxu0 0
    %1901 = vmatprep.subr.bf16.mxu0 0
    %1902 = vmatpush1.bf16.msra.mxu0 0
    %1903 = vmatprep.subr.bf16.mxu0 0
    %1904 = vmatpush1.bf16.msra.mxu0 0
    %1905 = vmatprep.mubr.bf16.mxu0 0
    %1906 = vmatmul.mubr.bf16.gmra.mrb[0].mxu0 %v1801
    %v1907 = vpop.f32.mrb[0].mxu0
    %v1908 = vadd.f32 %v1823, %v1907
    %v1909 = vpop.f32.mrb[0].mxu0
    %v1910 = vpop.f32.mrb[0].mxu0
    %v1911 = vpop.f32.mrb[0].mxu0
    %1912 = vdwg.mxu0
    %v1913 = vmax.f32 %v1908, 0.0
    %v1914 = vpack.c.bf16 %v1913, %v1913
    %v1915 = vld [vmem:[%s17] sm:$0xff]
    %v1916 = vld [vmem:[%s17 + $0x8] sm:$0xff]
    %v1917 = vld [vmem:[%s17 + $0x10] sm:$0xff]
    %v1918 = vld [vmem:[%s17 + $0x18] sm:$0xff]
    %v1919 = vld [vmem:[%s17 + $0x20] sm:$0xff]
    %v1920 = vld [vmem:[%s17 + $0x28] sm:$0xff]
    %v1921 = vld [vmem:[%s17 + $0x30] sm:$0xff]
    %v1922 = vld [vmem:[%s17 + $0x38] sm:$0xff]
    %v1923 = vld [vmem:[%s17 + $0x40] sm:$0xff]
    %v1924 = vld [vmem:[%s17 + $0x48] sm:$0xff]
    %v1925 = vld [vmem:[%s17 + $0x50] sm:$0xff]
    %v1926 = vld [vmem:[%s17 + $0x58] sm:$0xff]
    %v1927 = vld [vmem:[%s17 + $0x60] sm:$0xff]
    %v1928 = vld [vmem:[%s17 + $0x68] sm:$0xff]
    %v1929 = vld [vmem:[%s17 + $0x70] sm:$0xff]
    %v1930 = vld [vmem:[%s17 + $0x78] sm:$0xff]
    %v1931 = vld [vmem:[%s17 + $0x80] sm:$0xff]
    %v1932 = vld [vmem:[%s17 + $0x88] sm:$0xff]
    %v1933 = vld [vmem:[%s17 + $0x90] sm:$0xff]
    %v1934 = vld [vmem:[%s17 + $0x98] sm:$0xff]
    %v1935 = vld [vmem:[%s17 + $0xa0] sm:$0xff]
    %v1936 = vld [vmem:[%s17 + $0xa8] sm:$0xff]
    %v1937 = vld [vmem:[%s17 + $0xb0] sm:$0xff]
    %v1938 = vld [vmem:[%s17 + $0xb8] sm:$0xff]
    %v1939 = vld [vmem:[%s17 + $0xc0] sm:$0xff]
    %v1940 = vld [vmem:[%s17 + $0xc8] sm:$0xff]
    %v1941 = vld [vmem:[%s17 + $0xd0] sm:$0xff]
    %v1942 = vld [vmem:[%s17 + $0xd8] sm:$0xff]
    %v1943 = vld [vmem:[%s17 + $0xe0] sm:$0xff]
    %v1944 = vld [vmem:[%s17 + $0xe8] sm:$0xff]
    %v1945 = vld [vmem:[%s17 + $0xf0] sm:$0xff]
    %v1946 = vld [vmem:[%s17 + $0xf8] sm:$0xff]
    %v1947 = vld [vmem:[%s17 + $0x100] sm:$0xff]
    %v1948 = vld [vmem:[%s17 + $0x108] sm:$0xff]
    %v1949 = vld [vmem:[%s17 + $0x110] sm:$0xff]
    %v1950 = vld [vmem:[%s17 + $0x118] sm:$0xff]
    %v1951 = vld [vmem:[%s17 + $0x120] sm:$0xff]
    %v1952 = vld [vmem:[%s17 + $0x128] sm:$0xff]
    %v1953 = vld [vmem:[%s17 + $0x130] sm:$0xff]
    %v1954 = vld [vmem:[%s17 + $0x138] sm:$0xff]
    %v1955 = vld [vmem:[%s17 + $0x140] sm:$0xff]
    %v1956 = vld [vmem:[%s17 + $0x148] sm:$0xff]
    %v1957 = vld [vmem:[%s17 + $0x150] sm:$0xff]
    %v1958 = vld [vmem:[%s17 + $0x158] sm:$0xff]
    %v1959 = vld [vmem:[%s17 + $0x160] sm:$0xff]
    %v1960 = vld [vmem:[%s17 + $0x168] sm:$0xff]
    %v1961 = vld [vmem:[%s17 + $0x170] sm:$0xff]
    %v1962 = vld [vmem:[%s17 + $0x178] sm:$0xff]
    %v1963 = vld [vmem:[%s17 + $0x180] sm:$0xff]
    %v1964 = vld [vmem:[%s17 + $0x188] sm:$0xff]
    %v1965 = vld [vmem:[%s17 + $0x190] sm:$0xff]
    %v1966 = vld [vmem:[%s17 + $0x198] sm:$0xff]
    %v1967 = vld [vmem:[%s17 + $0x1a0] sm:$0xff]
    %v1968 = vld [vmem:[%s17 + $0x1a8] sm:$0xff]
    %v1969 = vld [vmem:[%s17 + $0x1b0] sm:$0xff]
    %v1970 = vld [vmem:[%s17 + $0x1b8] sm:$0xff]
    %v1971 = vld [vmem:[%s17 + $0x1c0] sm:$0xff]
    %v1972 = vld [vmem:[%s17 + $0x1c8] sm:$0xff]
    %v1973 = vld [vmem:[%s17 + $0x1d0] sm:$0xff]
    %v1974 = vld [vmem:[%s17 + $0x1d8] sm:$0xff]
    %v1975 = vld [vmem:[%s17 + $0x1e0] sm:$0xff]
    %v1976 = vld [vmem:[%s17 + $0x1e8] sm:$0xff]
    %v1977 = vld [vmem:[%s17 + $0x1f0] sm:$0xff]
    %v1978 = vld [vmem:[%s17 + $0x1f8] sm:$0xff]
    %v1979 = vld [vmem:[%s18] sm:$0xff]
    %v1981 = vlaneseq
    %v1982 = vshrl.u32 %v1981, 7
    %v1983 = vsub.s32 0, %v1982
    %v1984 = vrot.slane %v1979, %v1983
    %v1985 = vlaneseq
    %v1986 = vshrl.u32 %v1985, 7
    %v1987 = vsub.s32 1, %v1986
    %v1988 = vrot.slane %v1979, %v1987
    %v1989 = vlaneseq
    %v1990 = vshrl.u32 %v1989, 7
    %v1991 = vsub.s32 2, %v1990
    %v1992 = vrot.slane %v1979, %v1991
    %v1993 = vlaneseq
    %v1994 = vshrl.u32 %v1993, 7
    %v1995 = vsub.s32 3, %v1994
    %v1996 = vrot.slane %v1979, %v1995
    %v1997 = vlaneseq
    %v1998 = vshrl.u32 %v1997, 7
    %v1999 = vsub.s32 4, %v1998
    %v2000 = vrot.slane %v1979, %v1999
    %v2001 = vlaneseq
    %v2002 = vshrl.u32 %v2001, 7
    %v2003 = vsub.s32 5, %v2002
    %v2004 = vrot.slane %v1979, %v2003
    %v2005 = vlaneseq
    %v2006 = vshrl.u32 %v2005, 7
    %v2007 = vsub.s32 6, %v2006
    %v2008 = vrot.slane %v1979, %v2007
    %v2009 = vlaneseq
    %v2010 = vshrl.u32 %v2009, 7
    %v2011 = vsub.s32 7, %v2010
    %v2012 = vrot.slane %v1979, %v2011
    %v2085 = vunpack.c.l.b16 %v1915
    %v2086 = vunpack.c.h.b16 %v1915
    %v2087 = vunpack.c.l.b16 %v1916
    %v2088 = vunpack.c.h.b16 %v1916
    %v2089 = vunpack.c.l.b16 %v1917
    %v2090 = vunpack.c.h.b16 %v1917
    %v2091 = vunpack.c.l.b16 %v1918
    %v2092 = vunpack.c.h.b16 %v1918
    %v2093 = vunpack.c.l.b16 %v1919
    %v2094 = vunpack.c.h.b16 %v1919
    %v2095 = vunpack.c.l.b16 %v1920
    %v2096 = vunpack.c.h.b16 %v1920
    %v2097 = vunpack.c.l.b16 %v1921
    %v2098 = vunpack.c.h.b16 %v1921
    %v2099 = vunpack.c.l.b16 %v1922
    %v2100 = vunpack.c.h.b16 %v1922
    %v2101 = vunpack.c.l.b16 %v1923
    %v2102 = vunpack.c.h.b16 %v1923
    %v2103 = vunpack.c.l.b16 %v1924
    %v2104 = vunpack.c.h.b16 %v1924
    %v2105 = vunpack.c.l.b16 %v1925
    %v2106 = vunpack.c.h.b16 %v1925
    %v2107 = vunpack.c.l.b16 %v1926
    %v2108 = vunpack.c.h.b16 %v1926
    %v2109 = vunpack.c.l.b16 %v1927
    %v2110 = vunpack.c.h.b16 %v1927
    %v2111 = vunpack.c.l.b16 %v1928
    %v2112 = vunpack.c.h.b16 %v1928
    %v2113 = vunpack.c.l.b16 %v1929
    %v2114 = vunpack.c.h.b16 %v1929
    %v2115 = vunpack.c.l.b16 %v1930
    %v2116 = vunpack.c.h.b16 %v1930
    %v2117 = vunpack.c.l.b16 %v1931
    %v2118 = vunpack.c.h.b16 %v1931
    %v2119 = vunpack.c.l.b16 %v1932
    %v2120 = vunpack.c.h.b16 %v1932
    %v2121 = vunpack.c.l.b16 %v1933
    %v2122 = vunpack.c.h.b16 %v1933
    %v2123 = vunpack.c.l.b16 %v1934
    %v2124 = vunpack.c.h.b16 %v1934
    %v2125 = vunpack.c.l.b16 %v1935
    %v2126 = vunpack.c.h.b16 %v1935
    %v2127 = vunpack.c.l.b16 %v1936
    %v2128 = vunpack.c.h.b16 %v1936
    %v2129 = vunpack.c.l.b16 %v1937
    %v2130 = vunpack.c.h.b16 %v1937
    %v2131 = vunpack.c.l.b16 %v1938
    %v2132 = vunpack.c.h.b16 %v1938
    %v2133 = vunpack.c.l.b16 %v1939
    %v2134 = vunpack.c.h.b16 %v1939
    %v2135 = vunpack.c.l.b16 %v1940
    %v2136 = vunpack.c.h.b16 %v1940
    %v2137 = vunpack.c.l.b16 %v1941
    %v2138 = vunpack.c.h.b16 %v1941
    %v2139 = vunpack.c.l.b16 %v1942
    %v2140 = vunpack.c.h.b16 %v1942
    %v2141 = vunpack.c.l.b16 %v1943
    %v2142 = vunpack.c.h.b16 %v1943
    %v2143 = vunpack.c.l.b16 %v1944
    %v2144 = vunpack.c.h.b16 %v1944
    %v2145 = vunpack.c.l.b16 %v1945
    %v2146 = vunpack.c.h.b16 %v1945
    %v2147 = vunpack.c.l.b16 %v1946
    %v2148 = vunpack.c.h.b16 %v1946
    %v2149 = vunpack.c.l.b16 %v1947
    %v2150 = vunpack.c.h.b16 %v1947
    %v2151 = vunpack.c.l.b16 %v1948
    %v2152 = vunpack.c.h.b16 %v1948
    %v2153 = vunpack.c.l.b16 %v1949
    %v2154 = vunpack.c.h.b16 %v1949
    %v2155 = vunpack.c.l.b16 %v1950
    %v2156 = vunpack.c.h.b16 %v1950
    %v2157 = vunpack.c.l.b16 %v1951
    %v2158 = vunpack.c.h.b16 %v1951
    %v2159 = vunpack.c.l.b16 %v1952
    %v2160 = vunpack.c.h.b16 %v1952
    %v2161 = vunpack.c.l.b16 %v1953
    %v2162 = vunpack.c.h.b16 %v1953
    %v2163 = vunpack.c.l.b16 %v1954
    %v2164 = vunpack.c.h.b16 %v1954
    %v2165 = vunpack.c.l.b16 %v1955
    %v2166 = vunpack.c.h.b16 %v1955
    %v2167 = vunpack.c.l.b16 %v1956
    %v2168 = vunpack.c.h.b16 %v1956
    %v2169 = vunpack.c.l.b16 %v1957
    %v2170 = vunpack.c.h.b16 %v1957
    %v2171 = vunpack.c.l.b16 %v1958
    %v2172 = vunpack.c.h.b16 %v1958
    %v2173 = vunpack.c.l.b16 %v1959
    %v2174 = vunpack.c.h.b16 %v1959
    %v2175 = vunpack.c.l.b16 %v1960
    %v2176 = vunpack.c.h.b16 %v1960
    %v2177 = vunpack.c.l.b16 %v1961
    %v2178 = vunpack.c.h.b16 %v1961
    %v2179 = vunpack.c.l.b16 %v1962
    %v2180 = vunpack.c.h.b16 %v1962
    %v2181 = vunpack.c.l.b16 %v1963
    %v2182 = vunpack.c.h.b16 %v1963
    %v2183 = vunpack.c.l.b16 %v1964
    %v2184 = vunpack.c.h.b16 %v1964
    %v2185 = vunpack.c.l.b16 %v1965
    %v2186 = vunpack.c.h.b16 %v1965
    %v2187 = vunpack.c.l.b16 %v1966
    %v2188 = vunpack.c.h.b16 %v1966
    %v2189 = vunpack.c.l.b16 %v1967
    %v2190 = vunpack.c.h.b16 %v1967
    %v2191 = vunpack.c.l.b16 %v1968
    %v2192 = vunpack.c.h.b16 %v1968
    %v2193 = vunpack.c.l.b16 %v1969
    %v2194 = vunpack.c.h.b16 %v1969
    %v2195 = vunpack.c.l.b16 %v1970
    %v2196 = vunpack.c.h.b16 %v1970
    %v2197 = vunpack.c.l.b16 %v1971
    %v2198 = vunpack.c.h.b16 %v1971
    %v2199 = vunpack.c.l.b16 %v1972
    %v2200 = vunpack.c.h.b16 %v1972
    %v2201 = vunpack.c.l.b16 %v1973
    %v2202 = vunpack.c.h.b16 %v1973
    %v2203 = vunpack.c.l.b16 %v1974
    %v2204 = vunpack.c.h.b16 %v1974
    %v2205 = vunpack.c.l.b16 %v1975
    %v2206 = vunpack.c.h.b16 %v1975
    %v2207 = vunpack.c.l.b16 %v1976
    %v2208 = vunpack.c.h.b16 %v1976
    %v2209 = vunpack.c.l.b16 %v1977
    %v2210 = vunpack.c.h.b16 %v1977
    %v2211 = vunpack.c.l.b16 %v1978
    %v2212 = vunpack.c.h.b16 %v1978
    %v2213 = vpack.c.b16 %v2093, %v2085
    %v2214 = vpack.c.b16 %v2094, %v2086
    %v2215 = vpack.c.b16 %v2095, %v2087
    %v2216 = vpack.c.b16 %v2096, %v2088
    %v2217 = vpack.c.b16 %v2097, %v2089
    %v2218 = vpack.c.b16 %v2098, %v2090
    %v2219 = vpack.c.b16 %v2099, %v2091
    %v2220 = vpack.c.b16 %v2100, %v2092
    %v2221 = vpack.c.b16 %v2109, %v2101
    %v2222 = vpack.c.b16 %v2110, %v2102
    %v2223 = vpack.c.b16 %v2111, %v2103
    %v2224 = vpack.c.b16 %v2112, %v2104
    %v2225 = vpack.c.b16 %v2113, %v2105
    %v2226 = vpack.c.b16 %v2114, %v2106
    %v2227 = vpack.c.b16 %v2115, %v2107
    %v2228 = vpack.c.b16 %v2116, %v2108
    %v2229 = vpack.c.b16 %v2125, %v2117
    %v2230 = vpack.c.b16 %v2126, %v2118
    %v2231 = vpack.c.b16 %v2127, %v2119
    %v2232 = vpack.c.b16 %v2128, %v2120
    %v2233 = vpack.c.b16 %v2129, %v2121
    %v2234 = vpack.c.b16 %v2130, %v2122
    %v2235 = vpack.c.b16 %v2131, %v2123
    %v2236 = vpack.c.b16 %v2132, %v2124
    %v2237 = vpack.c.b16 %v2141, %v2133
    %v2238 = vpack.c.b16 %v2142, %v2134
    %v2239 = vpack.c.b16 %v2143, %v2135
    %v2240 = vpack.c.b16 %v2144, %v2136
    %v2241 = vpack.c.b16 %v2145, %v2137
    %v2242 = vpack.c.b16 %v2146, %v2138
    %v2243 = vpack.c.b16 %v2147, %v2139
    %v2244 = vpack.c.b16 %v2148, %v2140
    %v2245 = vpack.c.b16 %v2157, %v2149
    %v2246 = vpack.c.b16 %v2158, %v2150
    %v2247 = vpack.c.b16 %v2159, %v2151
    %v2248 = vpack.c.b16 %v2160, %v2152
    %v2249 = vpack.c.b16 %v2161, %v2153
    %v2250 = vpack.c.b16 %v2162, %v2154
    %v2251 = vpack.c.b16 %v2163, %v2155
    %v2252 = vpack.c.b16 %v2164, %v2156
    %v2253 = vpack.c.b16 %v2173, %v2165
    %v2254 = vpack.c.b16 %v2174, %v2166
    %v2255 = vpack.c.b16 %v2175, %v2167
    %v2256 = vpack.c.b16 %v2176, %v2168
    %v2257 = vpack.c.b16 %v2177, %v2169
    %v2258 = vpack.c.b16 %v2178, %v2170
    %v2259 = vpack.c.b16 %v2179, %v2171
    %v2260 = vpack.c.b16 %v2180, %v2172
    %v2261 = vpack.c.b16 %v2189, %v2181
    %v2262 = vpack.c.b16 %v2190, %v2182
    %v2263 = vpack.c.b16 %v2191, %v2183
    %v2264 = vpack.c.b16 %v2192, %v2184
    %v2265 = vpack.c.b16 %v2193, %v2185
    %v2266 = vpack.c.b16 %v2194, %v2186
    %v2267 = vpack.c.b16 %v2195, %v2187
    %v2268 = vpack.c.b16 %v2196, %v2188
    %v2269 = vpack.c.b16 %v2205, %v2197
    %v2270 = vpack.c.b16 %v2206, %v2198
    %v2271 = vpack.c.b16 %v2207, %v2199
    %v2272 = vpack.c.b16 %v2208, %v2200
    %v2273 = vpack.c.b16 %v2209, %v2201
    %v2274 = vpack.c.b16 %v2210, %v2202
    %v2275 = vpack.c.b16 %v2211, %v2203
    %v2276 = vpack.c.b16 %v2212, %v2204
    %2341 = vmatprep.subr.bf16.mxu0 %v2214
    %2342 = vmatpush1.bf16.msra.mxu0 %v2213
    %2343 = vmatprep.subr.bf16.mxu0 %v2222
    %2344 = vmatpush1.bf16.msra.mxu0 %v2221
    %2345 = vmatprep.subr.bf16.mxu0 %v2230
    %2346 = vmatpush1.bf16.msra.mxu0 %v2229
    %2347 = vmatprep.subr.bf16.mxu0 %v2238
    %2348 = vmatpush1.bf16.msra.mxu0 %v2237
    %2349 = vmatprep.subr.bf16.mxu0 %v2246
    %2350 = vmatpush1.bf16.msra.mxu0 %v2245
    %2351 = vmatprep.subr.bf16.mxu0 %v2254
    %2352 = vmatpush1.bf16.msra.mxu0 %v2253
    %2353 = vmatprep.subr.bf16.mxu0 %v2262
    %2354 = vmatpush1.bf16.msra.mxu0 %v2261
    %2355 = vmatprep.subr.bf16.mxu0 %v2270
    %2356 = vmatpush1.bf16.msra.mxu0 %v2269
    %2357 = vmatprep.subr.bf16.mxu0 0
    %2358 = vmatpush1.bf16.msra.mxu0 0
    %2359 = vmatprep.subr.bf16.mxu0 0
    %2360 = vmatpush1.bf16.msra.mxu0 0
    %2361 = vmatprep.subr.bf16.mxu0 0
    %2362 = vmatpush1.bf16.msra.mxu0 0
    %2363 = vmatprep.subr.bf16.mxu0 0
    %2364 = vmatpush1.bf16.msra.mxu0 0
    %2365 = vmatprep.subr.bf16.mxu0 0
    %2366 = vmatpush1.bf16.msra.mxu0 0
    %2367 = vmatprep.subr.bf16.mxu0 0
    %2368 = vmatpush1.bf16.msra.mxu0 0
    %2369 = vmatprep.subr.bf16.mxu0 0
    %2370 = vmatpush1.bf16.msra.mxu0 0
    %2371 = vmatprep.subr.bf16.mxu0 0
    %2372 = vmatpush1.bf16.msra.mxu0 0
    %2373 = vmatprep.mubr.bf16.mxu0 0
    %2374 = vmatmul.mubr.bf16.gmra.mrb[0].mxu0 %v1914
    %v2375 = vpop.f32.mrb[0].mxu0
    %v2376 = vadd.f32 %v1984, %v2375
    %v2377 = vpop.f32.mrb[0].mxu0
    %v2378 = vadd.f32 %v1988, %v2377
    %v2379 = vpop.f32.mrb[0].mxu0
    %v2380 = vpop.f32.mrb[0].mxu0
    %2381 = vdwg.mxu0
    %2382 = vmatprep.subr.bf16.mxu0 %v2216
    %2383 = vmatpush1.bf16.msra.mxu0 %v2215
    %2384 = vmatprep.subr.bf16.mxu0 %v2224
    %2385 = vmatpush1.bf16.msra.mxu0 %v2223
    %2386 = vmatprep.subr.bf16.mxu0 %v2232
    %2387 = vmatpush1.bf16.msra.mxu0 %v2231
    %2388 = vmatprep.subr.bf16.mxu0 %v2240
    %2389 = vmatpush1.bf16.msra.mxu0 %v2239
    %2390 = vmatprep.subr.bf16.mxu0 %v2248
    %2391 = vmatpush1.bf16.msra.mxu0 %v2247
    %2392 = vmatprep.subr.bf16.mxu0 %v2256
    %2393 = vmatpush1.bf16.msra.mxu0 %v2255
    %2394 = vmatprep.subr.bf16.mxu0 %v2264
    %2395 = vmatpush1.bf16.msra.mxu0 %v2263
    %2396 = vmatprep.subr.bf16.mxu0 %v2272
    %2397 = vmatpush1.bf16.msra.mxu0 %v2271
    %2398 = vmatprep.subr.bf16.mxu0 0
    %2399 = vmatpush1.bf16.msra.mxu0 0
    %2400 = vmatprep.subr.bf16.mxu0 0
    %2401 = vmatpush1.bf16.msra.mxu0 0
    %2402 = vmatprep.subr.bf16.mxu0 0
    %2403 = vmatpush1.bf16.msra.mxu0 0
    %2404 = vmatprep.subr.bf16.mxu0 0
    %2405 = vmatpush1.bf16.msra.mxu0 0
    %2406 = vmatprep.subr.bf16.mxu0 0
    %2407 = vmatpush1.bf16.msra.mxu0 0
    %2408 = vmatprep.subr.bf16.mxu0 0
    %2409 = vmatpush1.bf16.msra.mxu0 0
    %2410 = vmatprep.subr.bf16.mxu0 0
    %2411 = vmatpush1.bf16.msra.mxu0 0
    %2412 = vmatprep.subr.bf16.mxu0 0
    %2413 = vmatpush1.bf16.msra.mxu0 0
    %2414 = vmatprep.mubr.bf16.mxu0 0
    %2415 = vmatmul.mubr.bf16.gmra.mrb[0].mxu0 %v1914
    %v2416 = vpop.f32.mrb[0].mxu0
    %v2417 = vadd.f32 %v1992, %v2416
    %v2418 = vpop.f32.mrb[0].mxu0
    %v2419 = vadd.f32 %v1996, %v2418
    %v2420 = vpop.f32.mrb[0].mxu0
    %v2421 = vpop.f32.mrb[0].mxu0
    %2422 = vdwg.mxu0
    %2423 = vmatprep.subr.bf16.mxu0 %v2218
    %2424 = vmatpush1.bf16.msra.mxu0 %v2217
    %2425 = vmatprep.subr.bf16.mxu0 %v2226
    %2426 = vmatpush1.bf16.msra.mxu0 %v2225
    %2427 = vmatprep.subr.bf16.mxu0 %v2234
    %2428 = vmatpush1.bf16.msra.mxu0 %v2233
    %2429 = vmatprep.subr.bf16.mxu0 %v2242
    %2430 = vmatpush1.bf16.msra.mxu0 %v2241
    %2431 = vmatprep.subr.bf16.mxu0 %v2250
    %2432 = vmatpush1.bf16.msra.mxu0 %v2249
    %2433 = vmatprep.subr.bf16.mxu0 %v2258
    %2434 = vmatpush1.bf16.msra.mxu0 %v2257
    %2435 = vmatprep.subr.bf16.mxu0 %v2266
    %2436 = vmatpush1.bf16.msra.mxu0 %v2265
    %2437 = vmatprep.subr.bf16.mxu0 %v2274
    %2438 = vmatpush1.bf16.msra.mxu0 %v2273
    %2439 = vmatprep.subr.bf16.mxu0 0
    %2440 = vmatpush1.bf16.msra.mxu0 0
    %2441 = vmatprep.subr.bf16.mxu0 0
    %2442 = vmatpush1.bf16.msra.mxu0 0
    %2443 = vmatprep.subr.bf16.mxu0 0
    %2444 = vmatpush1.bf16.msra.mxu0 0
    %2445 = vmatprep.subr.bf16.mxu0 0
    %2446 = vmatpush1.bf16.msra.mxu0 0
    %2447 = vmatprep.subr.bf16.mxu0 0
    %2448 = vmatpush1.bf16.msra.mxu0 0
    %2449 = vmatprep.subr.bf16.mxu0 0
    %2450 = vmatpush1.bf16.msra.mxu0 0
    %2451 = vmatprep.subr.bf16.mxu0 0
    %2452 = vmatpush1.bf16.msra.mxu0 0
    %2453 = vmatprep.subr.bf16.mxu0 0
    %2454 = vmatpush1.bf16.msra.mxu0 0
    %2455 = vmatprep.mubr.bf16.mxu0 0
    %2456 = vmatmul.mubr.bf16.gmra.mrb[0].mxu0 %v1914
    %v2457 = vpop.f32.mrb[0].mxu0
    %v2458 = vadd.f32 %v2000, %v2457
    %v2459 = vpop.f32.mrb[0].mxu0
    %v2460 = vadd.f32 %v2004, %v2459
    %v2461 = vpop.f32.mrb[0].mxu0
    %v2462 = vpop.f32.mrb[0].mxu0
    %2463 = vdwg.mxu0
    %2464 = vmatprep.subr.bf16.mxu0 %v2220
    %2465 = vmatpush1.bf16.msra.mxu0 %v2219
    %2466 = vmatprep.subr.bf16.mxu0 %v2228
    %2467 = vmatpush1.bf16.msra.mxu0 %v2227
    %2468 = vmatprep.subr.bf16.mxu0 %v2236
    %2469 = vmatpush1.bf16.msra.mxu0 %v2235
    %2470 = vmatprep.subr.bf16.mxu0 %v2244
    %2471 = vmatpush1.bf16.msra.mxu0 %v2243
    %2472 = vmatprep.subr.bf16.mxu0 %v2252
    %2473 = vmatpush1.bf16.msra.mxu0 %v2251
    %2474 = vmatprep.subr.bf16.mxu0 %v2260
    %2475 = vmatpush1.bf16.msra.mxu0 %v2259
    %2476 = vmatprep.subr.bf16.mxu0 %v2268
    %2477 = vmatpush1.bf16.msra.mxu0 %v2267
    %2478 = vmatprep.subr.bf16.mxu0 %v2276
    %2479 = vmatpush1.bf16.msra.mxu0 %v2275
    %2480 = vmatprep.subr.bf16.mxu0 0
    %2481 = vmatpush1.bf16.msra.mxu0 0
    %2482 = vmatprep.subr.bf16.mxu0 0
    %2483 = vmatpush1.bf16.msra.mxu0 0
    %2484 = vmatprep.subr.bf16.mxu0 0
    %2485 = vmatpush1.bf16.msra.mxu0 0
    %2486 = vmatprep.subr.bf16.mxu0 0
    %2487 = vmatpush1.bf16.msra.mxu0 0
    %2488 = vmatprep.subr.bf16.mxu0 0
    %2489 = vmatpush1.bf16.msra.mxu0 0
    %2490 = vmatprep.subr.bf16.mxu0 0
    %2491 = vmatpush1.bf16.msra.mxu0 0
    %2492 = vmatprep.subr.bf16.mxu0 0
    %2493 = vmatpush1.bf16.msra.mxu0 0
    %2494 = vmatprep.subr.bf16.mxu0 0
    %2495 = vmatpush1.bf16.msra.mxu0 0
    %2496 = vmatprep.mubr.bf16.mxu0 0
    %2497 = vmatmul.mubr.bf16.gmra.mrb[0].mxu0 %v1914
    %v2498 = vpop.f32.mrb[0].mxu0
    %v2499 = vadd.f32 %v2008, %v2498
    %v2500 = vpop.f32.mrb[0].mxu0
    %v2501 = vadd.f32 %v2012, %v2500
    %v2502 = vpop.f32.mrb[0].mxu0
    %v2503 = vpop.f32.mrb[0].mxu0
    %2504 = vdwg.mxu0
    %2505 = vst [vmem:[%s19] sm:$0xff] %v2376
    %2506 = vst [vmem:[%s19 + $0x8] sm:$0xff] %v2378
    %2507 = vst [vmem:[%s19 + $0x10] sm:$0xff] %v2417
    %2508 = vst [vmem:[%s19 + $0x18] sm:$0xff] %v2419
    %2509 = vst [vmem:[%s19 + $0x20] sm:$0xff] %v2458
    %2510 = vst [vmem:[%s19 + $0x28] sm:$0xff] %v2460
    %2511 = vst [vmem:[%s19 + $0x30] sm:$0xff] %v2499
    %2512 = vst [vmem:[%s19 + $0x38] sm:$0xff] %v2501
    %v2513 = vsub.f32 %v2376, %v145
    %v2514 = vsub.f32 %v2378, %v146
    %v2515 = vsub.f32 %v2417, %v147
    %v2516 = vsub.f32 %v2419, %v148
    %v2517 = vsub.f32 %v2458, %v149
    %v2518 = vsub.f32 %v2460, %v150
    %v2519 = vsub.f32 %v2499, %v151
    %v2520 = vsub.f32 %v2501, %v152
    %v2521 = vmul.f32 %v2513, %v2513
    %v2522 = vmul.f32 %v2514, %v2514
    %v2523 = vmul.f32 %v2515, %v2515
    %v2524 = vmul.f32 %v2516, %v2516
    %v2525 = vmul.f32 %v2517, %v2517
    %v2526 = vmul.f32 %v2518, %v2518
    %v2527 = vmul.f32 %v2519, %v2519
    %v2528 = vmul.f32 %v2520, %v2520
    %v2529 = vadd.f32 %v2521, %v2522
    %v2530 = vadd.f32 %v2529, %v2523
    %v2531 = vadd.f32 %v2530, %v2524
    %v2532 = vadd.f32 %v2531, %v2525
    %v2533 = vadd.f32 %v2532, %v2526
    %v2534 = vadd.f32 %v2533, %v2527
    %v2535 = vadd.f32 %v2534, %v2528
    %2536 = vadd.xlane.f32.xlu0 %v2535
    %v2537 = vpop.xlane.xlu0 %2536
    %v2538 = vrot.slane %v2537, 4
    %v2539 = vadd.f32 %v2537, %v2538
    %v2540 = vrot.slane %v2539, 2
    %v2541 = vadd.f32 %v2539, %v2540
    %v2542 = vrot.slane %v2541, 1
    %v2543 = vadd.f32 %v2541, %v2542
    %s2544 = vtos %v2543
    %v2545 = vstv %s2544
    %v2546 = vsub.f32 0.0, %v2545
    %v2547 = vmul.f32 %v1800, %v1800
    %2548 = vadd.xlane.f32.xlu0 %v2547
    %v2549 = vpop.xlane.xlu0 %2548
    %v2550 = vrot.slane %v2549, 4
    %v2551 = vadd.f32 %v2549, %v2550
    %v2552 = vrot.slane %v2551, 2
    %v2553 = vadd.f32 %v2551, %v2552
    %v2554 = vrot.slane %v2553, 1
    %v2555 = vadd.f32 %v2553, %v2554
    %s2556 = vtos %v2555
    %v2557 = vstv %s2556
    %v2558 = vadd.f32 %v2557, 1881.9861
    %v2559 = vmul.f32 %v2558, -0.5
    %v2560 = vadd.f32 %v1525, 1e-08
    %v2561 = vlog2.pop %v2560
    %v2562 = vmul.f32 %v2561, 0.6931472
    %v2563 = vadd.f32 %v2562, 1.0
    %2564 = vadd.xlane.f32.xlu0 %v2563
    %v2565 = vpop.xlane.xlu0 %2564
    %v2566 = vrot.slane %v2565, 4
    %v2567 = vadd.f32 %v2565, %v2566
    %v2568 = vrot.slane %v2567, 2
    %v2569 = vadd.f32 %v2567, %v2568
    %v2570 = vrot.slane %v2569, 1
    %v2571 = vadd.f32 %v2569, %v2570
    %s2572 = vtos %v2571
    %v2573 = vstv %s2572
    %v2574 = vmul.f32 %v2573, 0.5
    %v2575 = vadd.f32 %v2546, %v2559
    %v2576 = vadd.f32 %v2575, %v2574
    %vm2577 = vcmask 0
    %2578 = vst.msk [vmem:[#allocation16] sm:$0x1] %vm2577, %v2576
    %v2579 = vmul.f32 %v1406, %v1406
    %v2580 = vsub.f32 %v2563, %v2579
    %v2581 = vsub.f32 %v2580, %v2560
    %v2582 = vmul.f32 %v2581, -0.5
    %v2583 = vrot.slane %v2582, 4
    %v2584 = vadd.f32 %v2582, %v2583
    %v2585 = vrot.slane %v2584, 2
    %v2586 = vadd.f32 %v2584, %v2585
    %v2587 = vrot.slane %v2586, 1
    %v2588 = vadd.f32 %v2586, %v2587
    %v2589 = vrcp.pop 8.0
    %v2590 = vmul.f32 %v2588, %v2589
    %2591 = vst [vmem:[#allocation14] sm:$0x1] %v2590
    %vm2592 = vcmp.gt.f32.partialorder %v2590, 0.01
    %v2593 = vsel %vm2592, 1, 0
    %v2594 = vcvt.s32.f32 %v2593
    %vm2595 = vcmask 1040384
    %v2596 = vsel %vm2595, %v2594, 0.0
    %2597 = vadd.xlane.f32.xlu0 %v2596
    %v2598 = vpop.xlane.xlu0 %2597
    %v2599 = vrot.slane %v2598, 4
    %v2600 = vadd.f32 %v2598, %v2599
    %v2601 = vrot.slane %v2600, 2
    %v2602 = vadd.f32 %v2600, %v2601
    %v2603 = vrot.slane %v2602, 1
    %v2604 = vadd.f32 %v2602, %v2603
    %s2605 = vtos %v2604
    %v2606 = vstv %s2605
    %2607 = vst.msk [vmem:[#allocation17] sm:$0x1] %vm2577, %v2606
    // Predicated region
    $region102: #{pyg_tree_vae_forward.1} parent=1 // pred_check
      _
    $region103: #{pyg_tree_vae_forward.1} parent=1 // pred_check_branch
      %2609 = sbr.rel (0) target = $region105
    $region104: #{pyg_tree_vae_forward.1} parent=1 // pred_region
      _
    $region105: #{pyg_tree_vae_forward.1} parent=1 // pred_fallthru
      _
    // Predicated region
    $region106: #{pyg_tree_vae_forward.1} parent=1 // pred_check
      _
    $region107: #{pyg_tree_vae_forward.1} parent=1 // pred_check_branch
      %2611 = sbr.rel (0) target = $region109
    $region108: #{pyg_tree_vae_forward.1} parent=1 // pred_region
      %s2613 = ssub.s32 128, 128
      %2614 = vsyncadd [#allocation4], %s2613
      %s2616 = sshll.u32 [#allocation13], 4
      %s2617 = int_to_ptr.vmem [resolvable:$true] %s2616
      %2619 = dma.vmem_to_hbm [thread:$0]  %s2617, 128, %s20, [#allocation4]
    $region109: #{pyg_tree_vae_forward.1} parent=1 // pred_fallthru
      _
    // Predicated region
    $region110: #{pyg_tree_vae_forward.1} parent=1 // pred_check
      _
    $region111: #{pyg_tree_vae_forward.1} parent=1 // pred_check_branch
      %2621 = sbr.rel (0) target = $region113
    $region112: #{pyg_tree_vae_forward.1} parent=1 // pred_region
      %s2623 = ssub.s32 16, 16
      %2624 = vsyncadd [#allocation15], %s2623
      %s2626 = sshll.u32 [#allocation14], 4
      %s2627 = int_to_ptr.vmem [resolvable:$true] %s2626
      %2629 = dma.vmem_to_hbm [thread:$0]  %s2627, 16, %s21, [#allocation15]
    $region113: #{pyg_tree_vae_forward.1} parent=1 // pred_fallthru
      _
    // Predicated region
    $region114: #{pyg_tree_vae_forward.1} parent=1 // pred_check
      _
    $region115: #{pyg_tree_vae_forward.1} parent=1 // pred_check_branch
      %2631 = sbr.rel (0) target = $region117
    $region116: #{pyg_tree_vae_forward.1} parent=1 // pred_region
      %s2633 = ssub.s32 16, 16
      %2634 = vsyncadd [#allocation15], %s2633
      %s2636 = sshll.u32 [#allocation16], 4
      %s2637 = int_to_ptr.vmem [resolvable:$true] %s2636
      %2639 = dma.vmem_to_hbm [thread:$0]  %s2637, 16, %s22, [#allocation15]
    $region117: #{pyg_tree_vae_forward.1} parent=1 // pred_fallthru
      _
    // Predicated region
    $region118: #{pyg_tree_vae_forward.1} parent=1 // pred_check
      _
    $region119: #{pyg_tree_vae_forward.1} parent=1 // pred_check_branch
      %2641 = sbr.rel (0) target = $region121
    $region120: #{pyg_tree_vae_forward.1} parent=1 // pred_region
      %s2643 = ssub.s32 16, 16
      %2644 = vsyncadd [#allocation18], %s2643
      %s2646 = sshll.u32 [#allocation17], 4
      %s2647 = int_to_ptr.vmem [resolvable:$true] %s2646
      %2649 = dma.vmem_to_hbm [thread:$0]  %s2647, 16, %s23, [#allocation18]
    $region121: #{pyg_tree_vae_forward.1} parent=1 // pred_fallthru
      _
    // Predicated region
    $region122: #{pyg_tree_vae_forward.1} parent=1 // pred_check
      _
    $region123: #{pyg_tree_vae_forward.1} parent=1 // pred_check_branch
      %2651 = sbr.rel (0) target = $region125
    $region124: #{pyg_tree_vae_forward.1} parent=1 // pred_region
      _
    $region125: #{pyg_tree_vae_forward.1} parent=1 // pred_fallthru
      _
    // Predicated region
    $region126: #{pyg_tree_vae_forward.1} parent=1 // pred_check
      _
    $region127: #{pyg_tree_vae_forward.1} parent=1 // pred_check_branch
      %2653 = sbr.rel (0) target = $region129
    $region128: #{pyg_tree_vae_forward.1} parent=1 // pred_region
      %2654 = dma.done [#allocation4], 128
    $region129: #{pyg_tree_vae_forward.1} parent=1 // pred_fallthru
      _
    // Predicated region
    $region130: #{pyg_tree_vae_forward.1} parent=1 // pred_check
      _
    $region131: #{pyg_tree_vae_forward.1} parent=1 // pred_check_branch
      %2656 = sbr.rel (0) target = $region133
    $region132: #{pyg_tree_vae_forward.1} parent=1 // pred_region
      %2657 = dma.done [#allocation15], 16
    $region133: #{pyg_tree_vae_forward.1} parent=1 // pred_fallthru
      _
    // Predicated region
    $region134: #{pyg_tree_vae_forward.1} parent=1 // pred_check
      _
    $region135: #{pyg_tree_vae_forward.1} parent=1 // pred_check_branch
      %2659 = sbr.rel (0) target = $region137
    $region136: #{pyg_tree_vae_forward.1} parent=1 // pred_region
      %2660 = dma.done [#allocation15], 16
    $region137: #{pyg_tree_vae_forward.1} parent=1 // pred_fallthru
      _
    // Predicated region
    $region138: #{pyg_tree_vae_forward.1} parent=1 // pred_check
      _
    $region139: #{pyg_tree_vae_forward.1} parent=1 // pred_check_branch
      %2662 = sbr.rel (0) target = $region141
    $region140: #{pyg_tree_vae_forward.1} parent=1 // pred_region
      %2663 = dma.done [#allocation18], 16
    $region141: #{pyg_tree_vae_forward.1} parent=1 // pred_fallthru
      _
    %2664 = vsyncpa [#allocation3], 1
    %2665 = vsyncpa [#allocation6], 1
    %2666 = vsyncpa [#allocation9], 1
    %2667 = vsyncpa [#allocation12], 1
    %2668 = vsyncpa [#allocation4], 1
    %2669 = vsyncpa [#allocation15], 1
    %2670 = vsyncpa [#allocation18], 1

</llo_original>
